<compile_context>
chip_gen: v5e
topology: v5e:2x2
jax: 0.10.0
libtpu: 0.0.40
codegen_flags: <defaults>
</compile_context>

<pallas_src>
import itertools
import numpy as np
import jax
import jax.numpy as jnp
from jax.experimental import pallas as pl
from jax.experimental.pallas import tpu as pltpu

# ----------------------------- configuration --------------------------------
DIM = 32                          # embedding dim
NUM_HEADS = 4
KEY_DIM = DIM // NUM_HEADS        # 8  (head_dim; TinyViTBlock passes attn_ratio=1)
ATTN_RATIO = 1
D = ATTN_RATIO * KEY_DIM          # 8
DH = D * NUM_HEADS                # 32
HKD = NUM_HEADS * KEY_DIM         # 32
QKV_DIM = 3 * HKD                 # 96
WINDOW = 4                        # window_size == input_resolution -> no partitioning
L = WINDOW * WINDOW               # 16 tokens
B = 2
BL = B * L                        # 32 rows (batch folded into sublanes)
BHL = B * NUM_HEADS * L           # 128 (batch+head expanded K/V rows = score lanes)
HID = 4 * DIM                     # mlp_ratio = 4
RANK = 4                          # LoRA rank
DEPTH = 2                         # BasicLayer depth
BLOCK_LORA = (True, False)        # block_lora_flags
SCALE = KEY_DIM ** (-0.5)
LN_EPS = 1e-5
BN_EPS = 1e-5
TAPS = 9                          # 3x3 depthwise conv taps
NEG_BIG = -1e9                    # finite "minus infinity" for cross-batch score lanes

# rows of the packed per-block vector slab (each lane-padded to 128)
(V_LN1W, V_LN1B, V_BQKV, V_BPROJ, V_BCONV,
 V_LN2W, V_LN2B, V_BFC1, V_BFC2) = range(9)
VEC_ROWS = 16

KPARAM_ORDER = ("vecs", "w_qkv", "bias", "w_proj", "conv", "w_fc1", "w_fc2")

_GELU_C = 0.7978845608028654      # sqrt(2/pi)


# --------------------- host-side constant tables (numpy) ---------------------
def _build_attention_bias_idxs():
    points = list(itertools.product(range(WINDOW), range(WINDOW)))
    offsets, idxs = {}, []
    for p1 in points:
        for p2 in points:
            off = (abs(p1[0] - p2[0]), abs(p1[1] - p2[1]))
            if off not in offsets:
                offsets[off] = len(offsets)
            idxs.append(offsets[off])
    return np.asarray(idxs, np.int32).reshape(L, L), len(offsets)


IDXS, N_OFFSETS = _build_attention_bias_idxs()


def _build_qkv_perm():
    # chunked-then-LoRA column order -> [Q heads | K heads | V heads], preserving the
    # module's chunked-split-then-interleaved-resplit semantics exactly.
    perm = np.zeros((QKV_DIM,), np.int32)
    for role in range(3):
        for h in range(NUM_HEADS):
            for i in range(KEY_DIM):
                perm[role * HKD + h * KEY_DIM + i] = h * 3 * KEY_DIM + role * KEY_DIM + i
    return perm


def _build_headmask():
    # row (b, h, l') keeps only the 8 lanes belonging to head h
    m = np.zeros((BHL, HKD), np.float32)
    for b in range(B):
        for h in range(NUM_HEADS):
            r0 = (b * NUM_HEADS + h) * L
            m[r0:r0 + L, h * KEY_DIM:(h + 1) * KEY_DIM] = 1.0
    return m


def _build_rep():
    # 0/1 replication: row (b, h, l') <- K/V row (b, l'); exact in bf16
    r = np.zeros((BHL, BL), np.float32)
    for b in range(B):
        for h in range(NUM_HEADS):
            for l in range(L):
                r[(b * NUM_HEADS + h) * L + l, b * L + l] = 1.0
    return r


def _build_bones():
    # per-head membership across BOTH batch blocks: cross-batch e's are exactly 0,
    # so every column's denominator equals its in-batch per-head sum (never 0 -> no NaN)
    head_of = np.tile(np.repeat(np.arange(NUM_HEADS), L), B)         # (BHL,)
    return (head_of[:, None] == head_of[None, :]).astype(np.float32)


def _build_conv_tables():
    # 3x3 depthwise conv as 9 sublane rolls of the (B*L, DIM) slab; masks kill
    # out-of-image (and hence cross-window / cross-batch) wrapped contributions.
    masks = np.zeros((TAPS, BL, 1), np.float32)
    shifts = []
    for t in range(TAPS):
        di, dj = t // 3 - 1, t % 3 - 1
        shifts.append(int((-(di * WINDOW + dj)) % BL))
        for b in range(B):
            for i in range(WINDOW):
                for j in range(WINDOW):
                    if 0 <= i + di < WINDOW and 0 <= j + dj < WINDOW:
                        masks[t, b * L + i * WINDOW + j, 0] = 1.0
    return masks, tuple(shifts)


PERM = _build_qkv_perm()
HEADMASK = _build_headmask()
REP = _build_rep()
BONES = _build_bones()
CONV_MASKS, CONV_SHIFTS = _build_conv_tables()


# --------------------------- shared math helpers ------------------------------
def _layer_norm(x, w, b):
    mu = jnp.mean(x, axis=-1, keepdims=True)
    xc = x - mu
    var = jnp.mean(xc * xc, axis=-1, keepdims=True)   # biased variance, like torch
    return xc * jax.lax.rsqrt(var + LN_EPS) * w + b


def _gelu_tanh(x):
    # TODO(synk): nn.GELU() defaults to the exact erf form; the tanh approximation is
    # used here (and in the in-script reference) since erf has no clean Mosaic lowering.
    return 0.5 * x * (1.0 + jnp.tanh(_GELU_C * (x + 0.044715 * x * x * x)))


# --------------------------------- kernel -------------------------------------
def basic_layer_kernel(x_ref, vecs_ref, wqkv_ref, bias_ref, wproj_ref, conv_ref,
                       wfc1_ref, wfc2_ref, hmask_ref, rep_ref, bones_ref, o_ref):
    bf16, f32 = jnp.bfloat16, jnp.float32
    x = x_ref[...]                                        # (BL, DIM) f32 slab

    for d in range(DEPTH):                                # both TinyViTBlocks fused
        vecs = vecs_ref[d]                                # (16, 128) packed vectors
        ln1_w = vecs[V_LN1W:V_LN1W + 1, :DIM]
        ln1_b = vecs[V_LN1B:V_LN1B + 1, :DIM]
        b_qkv = vecs[V_BQKV:V_BQKV + 1, :QKV_DIM]
        b_proj = vecs[V_BPROJ:V_BPROJ + 1, :DIM]
        b_conv = vecs[V_BCONV:V_BCONV + 1, :DIM]
        ln2_w = vecs[V_LN2W:V_LN2W + 1, :DIM]
        ln2_b = vecs[V_LN2B:V_LN2B + 1, :DIM]
        b_fc1 = vecs[V_BFC1:V_BFC1 + 1, :HID]
        b_fc2 = vecs[V_BFC2:V_BFC2 + 1, :DIM]

        # ---- attention: LoRA + scale folded into wqkv, columns head-permuted ----
        xn = _layer_norm(x, ln1_w, ln1_b)
        qkv = jnp.dot(xn.astype(bf16), wqkv_ref[d],
                      preferred_element_type=f32) + b_qkv                  # (BL, 96)
        q = qkv[:, :HKD]                                                   # scale folded
        kv = qkv[:, HKD:]                                                  # (BL, 64)
        # replicate K|V rows to (batch, head, token) order, then mask per-head lanes
        kv_exp = jnp.dot(rep_ref[...], kv.astype(bf16),
                         preferred_element_type=f32)                       # (BHL, 64)
        hmask = hmask_ref[...]
        kexp = (kv_exp[:, :HKD] * hmask).astype(bf16)                      # (BHL, HKD)
        vexp = (kv_exp[:, HKD:] * hmask).astype(bf16)
        # all batches + heads in one 128-lane score tile; cross-batch lanes get -1e9
        s = jax.lax.dot_general(q.astype(bf16), kexp,
                                dimension_numbers=(((1,), (1,)), ((), ())),
                                preferred_element_type=f32) + bias_ref[d]  # (BL, BHL)
        # segmented softmax is invariant to any per-row shift -> use the row max
        s = s - jnp.max(s, axis=-1, keepdims=True)
        e = jnp.exp(s)                                     # exactly 0 in cross-batch lanes
        denom = jnp.dot(e.astype(bf16), bones_ref[...],
                        preferred_element_type=f32)        # per-head sums, never 0
        p = (e * pl.reciprocal(denom, approx=True)).astype(bf16)
        attn = jnp.dot(p, vexp, preferred_element_type=f32)                # (BL, DH)
        x = x + jnp.dot(attn.astype(bf16), wproj_ref[d],
                        preferred_element_type=f32) + b_proj

        # ---- depthwise 3x3 conv (BN folded): 8 sublane rolls + 9 masked FMAs ----
        acc = conv_ref[d, 4] * x                                           # centre tap
        for t in range(TAPS):
            if CONV_SHIFTS[t] == 0:
                continue
            acc = acc + conv_ref[d, t] * pltpu.roll(x, shift=CONV_SHIFTS[t], axis=0)
        x = acc + b_conv

        # ---- MLP ----
        h = _layer_norm(x, ln2_w, ln2_b)
        h = jnp.dot(h.astype(bf16), wfc1_ref[d], preferred_element_type=f32) + b_fc1
        h = _gelu_tanh(h)
        h = jnp.dot(h.astype(bf16), wfc2_ref[d], preferred_element_type=f32) + b_fc2
        x = x + h

    o_ref[...] = x


# -------------------------------- wrapper --------------------------------------
def basic_layer_forward(x, kparams, consts):
    # layout plumbing (free in XLA): fold batch into sublanes before the call
    args = (x.reshape(BL, DIM),) + tuple(kparams) + tuple(consts)
    vmem = pltpu.MemorySpace.VMEM
    out = pl.pallas_call(
        basic_layer_kernel,
        out_shape=jax.ShapeDtypeStruct((BL, DIM), jnp.float32),
        # single-step launch: whole arrays staged once in VMEM, no double-buffering.
        # (On v7x with many windows, add a leading "parallel" grid axis over window
        #  groups instead, to shard across the two TensorCores.)
        in_specs=[pl.BlockSpec(memory_space=vmem) for _ in args],
        out_specs=pl.BlockSpec(memory_space=vmem),
    )(*args)
    return out.reshape(B, L, DIM)


# ----------------------- host-side parameter preparation -----------------------
def make_block_params(key, use_lora):
    ks = jax.random.split(key, 22)
    n = lambda k, shape, s: s * jax.random.normal(k, shape, jnp.float32)
    p = {
        "ln1_w": 1.0 + n(ks[0], (DIM,), 0.05),
        "ln1_b": n(ks[1], (DIM,), 0.05),
        "w_qkv": n(ks[2], (DIM, QKV_DIM), 0.1),
        "b_qkv": n(ks[3], (QKV_DIM,), 0.05),
        "attention_biases": n(ks[4], (NUM_HEADS, N_OFFSETS), 0.1),
        "w_proj": n(ks[5], (DH, DIM), 0.1),
        "b_proj": n(ks[6], (DIM,), 0.05),
        "conv_w": n(ks[11], (DIM, 1, 3, 3), 0.2),
        "bn_gamma": 1.0 + n(ks[12], (DIM,), 0.05),
        "bn_beta": n(ks[13], (DIM,), 0.05),
        "bn_mean": n(ks[14], (DIM,), 0.05),
        "bn_var": 1.0 + 0.1 * jnp.abs(jax.random.normal(ks[15], (DIM,), jnp.float32)),
        "ln2_w": 1.0 + n(ks[16], (DIM,), 0.05),
        "ln2_b": n(ks[17], (DIM,), 0.05),
        "w_fc1": n(ks[18], (DIM, HID), 0.1),
        "b_fc1": n(ks[19], (HID,), 0.05),
        "w_fc2": n(ks[20], (HID, DIM), 0.05),
        "b_fc2": n(ks[21], (DIM,), 0.05),
    }
    if use_lora:
        # NOTE: the module zero-inits lora_w_b_*; nonzero values exercise the LoRA path.
        p.update({
            "wa_q": n(ks[7], (HKD, RANK), 0.1),
            "wb_q": n(ks[8], (RANK, HKD), 0.1),
            "wa_v": n(ks[9], (HKD, RANK), 0.1),
            "wb_v": n(ks[10], (RANK, HKD), 0.1),
        })
    return p


def fold_block_params(p, use_lora):
    """LoRA->qkv fold, head permutation, scale fold, BN->conv fold, bias packing."""
    wq, wk, wv = p["w_qkv"][:, :HKD], p["w_qkv"][:, HKD:2 * HKD], p["w_qkv"][:, 2 * HKD:]
    bq, bk, bv = p["b_qkv"][:HKD], p["b_qkv"][HKD:2 * HKD], p["b_qkv"][2 * HKD:]
    if use_lora:
        mq = jnp.eye(HKD, dtype=jnp.float32) + p["wa_q"] @ p["wb_q"]
        mv = jnp.eye(HKD, dtype=jnp.float32) + p["wa_v"] @ p["wb_v"]
        wq, bq = wq @ mq, bq @ mq
        wv, bv = wv @ mv, bv @ mv
    w_fold = jnp.concatenate([wq, wk, wv], axis=1)[:, PERM]          # (DIM, 96)
    b_fold = jnp.concatenate([bq, bk, bv], axis=0)[PERM]             # (96,)
    # Fold key_dim^-0.5 into the *effective* Q columns (post-permutation: heads 2/3
    # draw their q slice from the k/v chunks, so scaling the chunked wq would be wrong).
    qscale = jnp.concatenate([jnp.full((HKD,), SCALE, jnp.float32),
                              jnp.ones((2 * HKD,), jnp.float32)])
    w_fold = w_fold * qscale[None, :]
    b_fold = b_fold * qscale

    # merged attention bias: per-head bias inside the own-batch block, -1e9 elsewhere
    ab = p["attention_biases"][:, IDXS]                              # (H, L, L)
    blk = jnp.transpose(ab, (1, 0, 2)).reshape(L, NUM_HEADS * L)     # (L, H*L)
    bias = jnp.full((BL, BHL), NEG_BIG, jnp.float32)
    for b in range(B):
        bias = bias.at[b * L:(b + 1) * L,
                       b * NUM_HEADS * L:(b + 1) * NUM_HEADS * L].set(blk)

    # depthwise conv: fuse BN, fold the per-tap channel weight into the boundary masks
    bn_scale = p["bn_gamma"] / jnp.sqrt(p["bn_var"] + BN_EPS)
    w_tap = (p["conv_w"][:, 0] * bn_scale[:, None, None]).reshape(DIM, TAPS).T  # (9,DIM)
    conv = jnp.asarray(CONV_MASKS) * w_tap[:, None, :]               # (9, BL, DIM)
    b_conv = p["bn_beta"] - p["bn_mean"] * bn_scale

    def row(v):
        v = jnp.asarray(v, jnp.float32)
        return jnp.pad(v, (0, 128 - v.shape[0]))

    rows = [row(p["ln1_w"]), row(p["ln1_b"]), row(b_fold), row(p["b_proj"]),
            row(b_conv), row(p["ln2_w"]), row(p["ln2_b"]), row(p["b_fc1"]),
            row(p["b_fc2"])]
    rows += [jnp.zeros((128,), jnp.float32)] * (VEC_ROWS - len(rows))
    vecs = jnp.stack(rows, axis=0)                                   # (16, 128)

    return dict(
        vecs=vecs,
        w_qkv=w_fold.astype(jnp.bfloat16),
        bias=bias,
        w_proj=p["w_proj"].astype(jnp.bfloat16),
        conv=conv,
        w_fc1=p["w_fc1"].astype(jnp.bfloat16),
        w_fc2=p["w_fc2"].astype(jnp.bfloat16),
    )


# ---------------------------- pure-JAX reference -------------------------------
def _ref_attention(x, p, use_lora):
    xn = _layer_norm(x, p["ln1_w"], p["ln1_b"])
    qkv = xn @ p["w_qkv"] + p["b_qkv"]
    q, k, v = qkv[..., :HKD], qkv[..., HKD:2 * HKD], qkv[..., 2 * HKD:]
    if use_lora:
        q = q + (q @ p["wa_q"]) @ p["wb_q"]
        v = v + (v @ p["wa_v"]) @ p["wb_v"]
    qkv_lora = jnp.concatenate([q, k, v], axis=-1).reshape(B, L, NUM_HEADS, 3 * KEY_DIM)
    qh = qkv_lora[..., :KEY_DIM].transpose(0, 2, 1, 3)
    kh = qkv_lora[..., KEY_DIM:2 * KEY_DIM].transpose(0, 2, 1, 3)
    vh = qkv_lora[..., 2 * KEY_DIM:].transpose(0, 2, 1, 3)
    ab = p["attention_biases"][:, IDXS]
    attn = jnp.einsum("bhld,bhmd->bhlm", qh, kh) * SCALE + ab[None]
    attn = jax.nn.softmax(attn, axis=-1)
    out = jnp.einsum("bhlm,bhmd->bhld", attn, vh).transpose(0, 2, 1, 3).reshape(B, L, DH)
    return out @ p["w_proj"] + p["b_proj"]


def _ref_block(x, p, use_lora):
    x = x + _ref_attention(x, p, use_lora)
    img = x.reshape(B, WINDOW, WINDOW, DIM).transpose(0, 3, 1, 2)         # (B, C, H, W)
    conv = jax.lax.conv_general_dilated(
        img, p["conv_w"], window_strides=(1, 1), padding="SAME",
        feature_group_count=DIM, dimension_numbers=("NCHW", "OIHW", "NCHW"))
    scale = p["bn_gamma"] / jnp.sqrt(p["bn_var"] + BN_EPS)
    conv = conv * scale[None, :, None, None] \
        + (p["bn_beta"] - p["bn_mean"] * scale)[None, :, None, None]
    x = conv.transpose(0, 2, 3, 1).reshape(B, L, DIM)
    h = _layer_norm(x, p["ln2_w"], p["ln2_b"])
    h = _gelu_tanh(h @ p["w_fc1"] + p["b_fc1"]) @ p["w_fc2"] + p["b_fc2"]
    return x + h


def ref_forward(x, raw_params):
    for d in range(DEPTH):
        x = _ref_block(x, raw_params[d], BLOCK_LORA[d])
    # downsample=None for this BasicLayer configuration
    return x


# ---------------------------------- main ---------------------------------------
if __name__ == "__main__":
    root = jax.random.PRNGKey(0)
    keys = jax.random.split(root, DEPTH + 1)
    x = jax.random.normal(keys[0], (B, L, DIM), jnp.float32)

    raw = [make_block_params(keys[1 + d], BLOCK_LORA[d]) for d in range(DEPTH)]
    folded = [fold_block_params(raw[d], BLOCK_LORA[d]) for d in range(DEPTH)]
    kparams = tuple(jnp.stack([f[name] for f in folded], axis=0) for name in KPARAM_ORDER)
    consts = (jnp.asarray(HEADMASK),                      # (BHL, HKD) f32 head mask
              jnp.asarray(REP, dtype=jnp.bfloat16),       # (BHL, BL)  0/1, exact in bf16
              jnp.asarray(BONES, dtype=jnp.bfloat16))     # (BHL, BHL) 0/1, exact in bf16

    out = jax.block_until_ready(basic_layer_forward(x, kparams, consts))
    ref = jax.block_until_ready(ref_forward(x, raw))

    # bf16 matmul operands + approx reciprocal -> slightly looser tolerance than f32.
    np.testing.assert_allclose(np.asarray(out), np.asarray(ref), rtol=2e-2, atol=2e-2)
    print("KERNEL_OK")
</pallas_src>

<mosaic_0001>
module attributes {stable_mosaic.version = 11 : i64} {
  func.func @basic_layer_kernel(%arg0: memref<32x32xf32, #tpu.memory_space<vmem>>, %arg1: memref<2x16x128xf32, #tpu.memory_space<vmem>>, %arg2: memref<2x32x96xbf16, #tpu.memory_space<vmem>>, %arg3: memref<2x32x128xf32, #tpu.memory_space<vmem>>, %arg4: memref<2x32x32xbf16, #tpu.memory_space<vmem>>, %arg5: memref<2x9x32x32xf32, #tpu.memory_space<vmem>>, %arg6: memref<2x32x128xbf16, #tpu.memory_space<vmem>>, %arg7: memref<2x128x32xbf16, #tpu.memory_space<vmem>>, %arg8: memref<128x32xf32, #tpu.memory_space<vmem>>, %arg9: memref<128x32xbf16, #tpu.memory_space<vmem>>, %arg10: memref<128x128xbf16, #tpu.memory_space<vmem>>, %arg11: memref<32x32xf32, #tpu.memory_space<vmem>>) attributes {dimension_semantics = [], scalar_prefetch = 0 : i64, scratch_operands = 0 : i64, tpu.core_type = #tpu.core_type<tc>} {
    %c0 = arith.constant 0 : index
    %c0_0 = arith.constant 0 : index
    %0 = vector.load %arg0[%c0, %c0_0] : memref<32x32xf32, #tpu.memory_space<vmem>>, vector<32x32xf32>
    %c0_1 = arith.constant 0 : index
    %c0_2 = arith.constant 0 : index
    %c0_3 = arith.constant 0 : index
    %1 = vector.load %arg1[%c0_1, %c0_2, %c0_3] : memref<2x16x128xf32, #tpu.memory_space<vmem>>, vector<1x16x128xf32>
    %2 = vector.shape_cast %1 : vector<1x16x128xf32> to vector<16x128xf32>
    %3 = vector.extract_strided_slice %2 {offsets = [0, 0], sizes = [1, 32], strides = [1, 1]} : vector<16x128xf32> to vector<1x32xf32>
    %4 = vector.extract_strided_slice %2 {offsets = [1, 0], sizes = [1, 32], strides = [1, 1]} : vector<16x128xf32> to vector<1x32xf32>
    %5 = vector.extract_strided_slice %2 {offsets = [2, 0], sizes = [1, 96], strides = [1, 1]} : vector<16x128xf32> to vector<1x96xf32>
    %6 = vector.extract_strided_slice %2 {offsets = [3, 0], sizes = [1, 32], strides = [1, 1]} : vector<16x128xf32> to vector<1x32xf32>
    %7 = vector.extract_strided_slice %2 {offsets = [4, 0], sizes = [1, 32], strides = [1, 1]} : vector<16x128xf32> to vector<1x32xf32>
    %8 = vector.extract_strided_slice %2 {offsets = [5, 0], sizes = [1, 32], strides = [1, 1]} : vector<16x128xf32> to vector<1x32xf32>
    %9 = vector.extract_strided_slice %2 {offsets = [6, 0], sizes = [1, 32], strides = [1, 1]} : vector<16x128xf32> to vector<1x32xf32>
    %10 = vector.extract_strided_slice %2 {offsets = [7, 0], sizes = [1, 128], strides = [1, 1]} : vector<16x128xf32> to vector<1x128xf32>
    %11 = vector.extract_strided_slice %2 {offsets = [8, 0], sizes = [1, 32], strides = [1, 1]} : vector<16x128xf32> to vector<1x32xf32>
    %cst = arith.constant dense<0.000000e+00> : vector<32xf32>
    %12 = vector.multi_reduction <add>, %0, %cst [1] : vector<32x32xf32> to vector<32xf32>
    %13 = vector.shape_cast %12 : vector<32xf32> to vector<32x1xf32>
    %cst_4 = arith.constant 3.200000e+01 : f32
    %14 = vector.broadcast %cst_4 : f32 to vector<32x1xf32>
    %15 = arith.divf %13, %14 : vector<32x1xf32>
    %16 = vector.broadcast %15 : vector<32x1xf32> to vector<32x32xf32>
    %17 = arith.subf %0, %16 : vector<32x32xf32>
    %18 = arith.mulf %17, %17 : vector<32x32xf32>
    %cst_5 = arith.constant dense<0.000000e+00> : vector<32xf32>
    %19 = vector.multi_reduction <add>, %18, %cst_5 [1] : vector<32x32xf32> to vector<32xf32>
    %20 = vector.shape_cast %19 : vector<32xf32> to vector<32x1xf32>
    %cst_6 = arith.constant 3.200000e+01 : f32
    %21 = vector.broadcast %cst_6 : f32 to vector<32x1xf32>
    %22 = arith.divf %20, %21 : vector<32x1xf32>
    %cst_7 = arith.constant 9.99999974E-6 : f32
    %23 = vector.broadcast %cst_7 : f32 to vector<32x1xf32>
    %24 = arith.addf %22, %23 : vector<32x1xf32>
    %25 = math.rsqrt %24 : vector<32x1xf32>
    %26 = vector.broadcast %25 : vector<32x1xf32> to vector<32x32xf32>
    %27 = arith.mulf %17, %26 : vector<32x32xf32>
    %28 = vector.broadcast %3 : vector<1x32xf32> to vector<32x32xf32>
    %29 = arith.mulf %27, %28 : vector<32x32xf32>
    %30 = vector.broadcast %4 : vector<1x32xf32> to vector<32x32xf32>
    %31 = arith.addf %29, %30 : vector<32x32xf32>
    %32 = arith.truncf %31 : vector<32x32xf32> to vector<32x32xbf16>
    %c0_8 = arith.constant 0 : index
    %c0_9 = arith.constant 0 : index
    %c0_10 = arith.constant 0 : index
    %33 = vector.load %arg2[%c0_8, %c0_9, %c0_10] : memref<2x32x96xbf16, #tpu.memory_space<vmem>>, vector<1x32x96xbf16>
    %34 = vector.shape_cast %33 : vector<1x32x96xbf16> to vector<32x96xbf16>
    %cst_11 = arith.constant dense<0.000000e+00> : vector<32x96xf32>
    %35 = tpu.matmul %32, %34, %cst_11 {dimension_numbers = #tpu.dot_dimension_numbers<[1], [0], [0], [1], [0, 0, 1, 1], [], []>} : vector<32x32xbf16>, vector<32x96xbf16>, vector<32x96xf32> -> vector<32x96xf32>
    %36 = vector.broadcast %5 : vector<1x96xf32> to vector<32x96xf32>
    %37 = arith.addf %35, %36 : vector<32x96xf32>
    %38 = vector.extract_strided_slice %37 {offsets = [0, 0], sizes = [32, 32], strides = [1, 1]} : vector<32x96xf32> to vector<32x32xf32>
    %39 = vector.extract_strided_slice %37 {offsets = [0, 32], sizes = [32, 64], strides = [1, 1]} : vector<32x96xf32> to vector<32x64xf32>
    %c0_12 = arith.constant 0 : index
    %c0_13 = arith.constant 0 : index
    %40 = vector.load %arg9[%c0_12, %c0_13] : memref<128x32xbf16, #tpu.memory_space<vmem>>, vector<128x32xbf16>
    %41 = arith.truncf %39 : vector<32x64xf32> to vector<32x64xbf16>
    %cst_14 = arith.constant dense<0.000000e+00> : vector<128x64xf32>
    %42 = tpu.matmul %40, %41, %cst_14 {dimension_numbers = #tpu.dot_dimension_numbers<[1], [0], [0], [1], [0, 0, 1, 1], [], []>} : vector<128x32xbf16>, vector<32x64xbf16>, vector<128x64xf32> -> vector<128x64xf32>
    %c0_15 = arith.constant 0 : index
    %c0_16 = arith.constant 0 : index
    %43 = vector.load %arg8[%c0_15, %c0_16] : memref<128x32xf32, #tpu.memory_space<vmem>>, vector<128x32xf32>
    %44 = vector.extract_strided_slice %42 {offsets = [0, 0], sizes = [128, 32], strides = [1, 1]} : vector<128x64xf32> to vector<128x32xf32>
    %45 = arith.mulf %44, %43 : vector<128x32xf32>
    %46 = arith.truncf %45 : vector<128x32xf32> to vector<128x32xbf16>
    %47 = vector.extract_strided_slice %42 {offsets = [0, 32], sizes = [128, 32], strides = [1, 1]} : vector<128x64xf32> to vector<128x32xf32>
    %48 = arith.mulf %47, %43 : vector<128x32xf32>
    %49 = arith.truncf %48 : vector<128x32xf32> to vector<128x32xbf16>
    %50 = arith.truncf %38 : vector<32x32xf32> to vector<32x32xbf16>
    %cst_17 = arith.constant dense<0.000000e+00> : vector<32x128xf32>
    %51 = tpu.matmul %50, %46, %cst_17 {dimension_numbers = #tpu.dot_dimension_numbers<[1], [1], [0], [0], [0, 0, 1, 0], [], []>} : vector<32x32xbf16>, vector<128x32xbf16>, vector<32x128xf32> -> vector<32x128xf32>
    %c0_18 = arith.constant 0 : index
    %c0_19 = arith.constant 0 : index
    %c0_20 = arith.constant 0 : index
    %52 = vector.load %arg3[%c0_18, %c0_19, %c0_20] : memref<2x32x128xf32, #tpu.memory_space<vmem>>, vector<1x32x128xf32>
    %53 = vector.shape_cast %52 : vector<1x32x128xf32> to vector<32x128xf32>
    %54 = arith.addf %51, %53 : vector<32x128xf32>
    %cst_21 = arith.constant dense<0xFF800000> : vector<32xf32>
    %55 = vector.multi_reduction <maximumf>, %54, %cst_21 [1] : vector<32x128xf32> to vector<32xf32>
    %56 = vector.shape_cast %55 : vector<32xf32> to vector<32x1xf32>
    %57 = vector.broadcast %56 : vector<32x1xf32> to vector<32x128xf32>
    %58 = arith.subf %54, %57 : vector<32x128xf32>
    %59 = math.exp %58 : vector<32x128xf32>
    %60 = arith.truncf %59 : vector<32x128xf32> to vector<32x128xbf16>
    %c0_22 = arith.constant 0 : index
    %c0_23 = arith.constant 0 : index
    %61 = vector.load %arg10[%c0_22, %c0_23] : memref<128x128xbf16, #tpu.memory_space<vmem>>, vector<128x128xbf16>
    %cst_24 = arith.constant dense<0.000000e+00> : vector<32x128xf32>
    %62 = tpu.matmul %60, %61, %cst_24 {dimension_numbers = #tpu.dot_dimension_numbers<[1], [0], [0], [1], [0, 0, 1, 1], [], []>} : vector<32x128xbf16>, vector<128x128xbf16>, vector<32x128xf32> -> vector<32x128xf32>
    %63 = tpu.reciprocal %62 {approx = true} : vector<32x128xf32> -> vector<32x128xf32>
    %64 = arith.mulf %59, %63 : vector<32x128xf32>
    %65 = arith.truncf %64 : vector<32x128xf32> to vector<32x128xbf16>
    %cst_25 = arith.constant dense<0.000000e+00> : vector<32x32xf32>
    %66 = tpu.matmul %65, %49, %cst_25 {dimension_numbers = #tpu.dot_dimension_numbers<[1], [0], [0], [1], [0, 0, 1, 1], [], []>} : vector<32x128xbf16>, vector<128x32xbf16>, vector<32x32xf32> -> vector<32x32xf32>
    %67 = arith.truncf %66 : vector<32x32xf32> to vector<32x32xbf16>
    %c0_26 = arith.constant 0 : index
    %c0_27 = arith.constant 0 : index
    %c0_28 = arith.constant 0 : index
    %68 = vector.load %arg4[%c0_26, %c0_27, %c0_28] : memref<2x32x32xbf16, #tpu.memory_space<vmem>>, vector<1x32x32xbf16>
    %69 = vector.shape_cast %68 : vector<1x32x32xbf16> to vector<32x32xbf16>
    %cst_29 = arith.constant dense<0.000000e+00> : vector<32x32xf32>
    %70 = tpu.matmul %67, %69, %cst_29 {dimension_numbers = #tpu.dot_dimension_numbers<[1], [0], [0], [1], [0, 0, 1, 1], [], []>} : vector<32x32xbf16>, vector<32x32xbf16>, vector<32x32xf32> -> vector<32x32xf32>
    %71 = arith.addf %0, %70 : vector<32x32xf32>
    %72 = vector.broadcast %6 : vector<1x32xf32> to vector<32x32xf32>
    %73 = arith.addf %71, %72 : vector<32x32xf32>
    %c0_30 = arith.constant 0 : index
    %c4 = arith.constant 4 : index
    %c0_31 = arith.constant 0 : index
    %c0_32 = arith.constant 0 : index
    %74 = vector.load %arg5[%c0_30, %c4, %c0_31, %c0_32] : memref<2x9x32x32xf32, #tpu.memory_space<vmem>>, vector<1x1x32x32xf32>
    %75 = vector.shape_cast %74 : vector<1x1x32x32xf32> to vector<32x32xf32>
    %76 = arith.mulf %75, %73 : vector<32x32xf32>
    %c0_33 = arith.constant 0 : index
    %c0_34 = arith.constant 0 : index
    %c0_35 = arith.constant 0 : index
    %c0_36 = arith.constant 0 : index
    %77 = vector.load %arg5[%c0_33, %c0_34, %c0_35, %c0_36] : memref<2x9x32x32xf32, #tpu.memory_space<vmem>>, vector<1x1x32x32xf32>
    %78 = vector.shape_cast %77 : vector<1x1x32x32xf32> to vector<32x32xf32>
    %c5_i32 = arith.constant 5 : i32
    %79 = tpu.dynamic_rotate %73 by %c5_i32 dim 0 : vector<32x32xf32>, i32 -> vector<32x32xf32>
    %80 = arith.mulf %78, %79 : vector<32x32xf32>
    %81 = arith.addf %76, %80 : vector<32x32xf32>
    %c0_37 = arith.constant 0 : index
    %c1 = arith.constant 1 : index
    %c0_38 = arith.constant 0 : index
    %c0_39 = arith.constant 0 : index
    %82 = vector.load %arg5[%c0_37, %c1, %c0_38, %c0_39] : memref<2x9x32x32xf32, #tpu.memory_space<vmem>>, vector<1x1x32x32xf32>
    %83 = vector.shape_cast %82 : vector<1x1x32x32xf32> to vector<32x32xf32>
    %c4_i32 = arith.constant 4 : i32
    %84 = tpu.dynamic_rotate %73 by %c4_i32 dim 0 : vector<32x32xf32>, i32 -> vector<32x32xf32>
    %85 = arith.mulf %83, %84 : vector<32x32xf32>
    %86 = arith.addf %81, %85 : vector<32x32xf32>
    %c0_40 = arith.constant 0 : index
    %c2 = arith.constant 2 : index
    %c0_41 = arith.constant 0 : index
    %c0_42 = arith.constant 0 : index
    %87 = vector.load %arg5[%c0_40, %c2, %c0_41, %c0_42] : memref<2x9x32x32xf32, #tpu.memory_space<vmem>>, vector<1x1x32x32xf32>
    %88 = vector.shape_cast %87 : vector<1x1x32x32xf32> to vector<32x32xf32>
    %c3_i32 = arith.constant 3 : i32
    %89 = tpu.dynamic_rotate %73 by %c3_i32 dim 0 : vector<32x32xf32>, i32 -> vector<32x32xf32>
    %90 = arith.mulf %88, %89 : vector<32x32xf32>
    %91 = arith.addf %86, %90 : vector<32x32xf32>
    %c0_43 = arith.constant 0 : index
    %c3 = arith.constant 3 : index
    %c0_44 = arith.constant 0 : index
    %c0_45 = arith.constant 0 : index
    %92 = vector.load %arg5[%c0_43, %c3, %c0_44, %c0_45] : memref<2x9x32x32xf32, #tpu.memory_space<vmem>>, vector<1x1x32x32xf32>
    %93 = vector.shape_cast %92 : vector<1x1x32x32xf32> to vector<32x32xf32>
    %c1_i32 = arith.constant 1 : i32
    %94 = tpu.dynamic_rotate %73 by %c1_i32 dim 0 : vector<32x32xf32>, i32 -> vector<32x32xf32>
    %95 = arith.mulf %93, %94 : vector<32x32xf32>
    %96 = arith.addf %91, %95 : vector<32x32xf32>
    %c0_46 = arith.constant 0 : index
    %c5 = arith.constant 5 : index
    %c0_47 = arith.constant 0 : index
    %c0_48 = arith.constant 0 : index
    %97 = vector.load %arg5[%c0_46, %c5, %c0_47, %c0_48] : memref<2x9x32x32xf32, #tpu.memory_space<vmem>>, vector<1x1x32x32xf32>
    %98 = vector.shape_cast %97 : vector<1x1x32x32xf32> to vector<32x32xf32>
    %c31_i32 = arith.constant 31 : i32
    %99 = tpu.dynamic_rotate %73 by %c31_i32 dim 0 : vector<32x32xf32>, i32 -> vector<32x32xf32>
    %100 = arith.mulf %98, %99 : vector<32x32xf32>
    %101 = arith.addf %96, %100 : vector<32x32xf32>
    %c0_49 = arith.constant 0 : index
    %c6 = arith.constant 6 : index
    %c0_50 = arith.constant 0 : index
    %c0_51 = arith.constant 0 : index
    %102 = vector.load %arg5[%c0_49, %c6, %c0_50, %c0_51] : memref<2x9x32x32xf32, #tpu.memory_space<vmem>>, vector<1x1x32x32xf32>
    %103 = vector.shape_cast %102 : vector<1x1x32x32xf32> to vector<32x32xf32>
    %c29_i32 = arith.constant 29 : i32
    %104 = tpu.dynamic_rotate %73 by %c29_i32 dim 0 : vector<32x32xf32>, i32 -> vector<32x32xf32>
    %105 = arith.mulf %103, %104 : vector<32x32xf32>
    %106 = arith.addf %101, %105 : vector<32x32xf32>
    %c0_52 = arith.constant 0 : index
    %c7 = arith.constant 7 : index
    %c0_53 = arith.constant 0 : index
    %c0_54 = arith.constant 0 : index
    %107 = vector.load %arg5[%c0_52, %c7, %c0_53, %c0_54] : memref<2x9x32x32xf32, #tpu.memory_space<vmem>>, vector<1x1x32x32xf32>
    %108 = vector.shape_cast %107 : vector<1x1x32x32xf32> to vector<32x32xf32>
    %c28_i32 = arith.constant 28 : i32
    %109 = tpu.dynamic_rotate %73 by %c28_i32 dim 0 : vector<32x32xf32>, i32 -> vector<32x32xf32>
    %110 = arith.mulf %108, %109 : vector<32x32xf32>
    %111 = arith.addf %106, %110 : vector<32x32xf32>
    %c0_55 = arith.constant 0 : index
    %c8 = arith.constant 8 : index
    %c0_56 = arith.constant 0 : index
    %c0_57 = arith.constant 0 : index
    %112 = vector.load %arg5[%c0_55, %c8, %c0_56, %c0_57] : memref<2x9x32x32xf32, #tpu.memory_space<vmem>>, vector<1x1x32x32xf32>
    %113 = vector.shape_cast %112 : vector<1x1x32x32xf32> to vector<32x32xf32>
    %c27_i32 = arith.constant 27 : i32
    %114 = tpu.dynamic_rotate %73 by %c27_i32 dim 0 : vector<32x32xf32>, i32 -> vector<32x32xf32>
    %115 = arith.mulf %113, %114 : vector<32x32xf32>
    %116 = arith.addf %111, %115 : vector<32x32xf32>
    %117 = vector.broadcast %7 : vector<1x32xf32> to vector<32x32xf32>
    %118 = arith.addf %116, %117 : vector<32x32xf32>
    %cst_58 = arith.constant dense<0.000000e+00> : vector<32xf32>
    %119 = vector.multi_reduction <add>, %118, %cst_58 [1] : vector<32x32xf32> to vector<32xf32>
    %120 = vector.shape_cast %119 : vector<32xf32> to vector<32x1xf32>
    %cst_59 = arith.constant 3.200000e+01 : f32
    %121 = vector.broadcast %cst_59 : f32 to vector<32x1xf32>
    %122 = arith.divf %120, %121 : vector<32x1xf32>
    %123 = vector.broadcast %122 : vector<32x1xf32> to vector<32x32xf32>
    %124 = arith.subf %118, %123 : vector<32x32xf32>
    %125 = arith.mulf %124, %124 : vector<32x32xf32>
    %cst_60 = arith.constant dense<0.000000e+00> : vector<32xf32>
    %126 = vector.multi_reduction <add>, %125, %cst_60 [1] : vector<32x32xf32> to vector<32xf32>
    %127 = vector.shape_cast %126 : vector<32xf32> to vector<32x1xf32>
    %cst_61 = arith.constant 3.200000e+01 : f32
    %128 = vector.broadcast %cst_61 : f32 to vector<32x1xf32>
    %129 = arith.divf %127, %128 : vector<32x1xf32>
    %cst_62 = arith.constant 9.99999974E-6 : f32
    %130 = vector.broadcast %cst_62 : f32 to vector<32x1xf32>
    %131 = arith.addf %129, %130 : vector<32x1xf32>
    %132 = math.rsqrt %131 : vector<32x1xf32>
    %133 = vector.broadcast %132 : vector<32x1xf32> to vector<32x32xf32>
    %134 = arith.mulf %124, %133 : vector<32x32xf32>
    %135 = vector.broadcast %8 : vector<1x32xf32> to vector<32x32xf32>
    %136 = arith.mulf %134, %135 : vector<32x32xf32>
    %137 = vector.broadcast %9 : vector<1x32xf32> to vector<32x32xf32>
    %138 = arith.addf %136, %137 : vector<32x32xf32>
    %139 = arith.truncf %138 : vector<32x32xf32> to vector<32x32xbf16>
    %c0_63 = arith.constant 0 : index
    %c0_64 = arith.constant 0 : index
    %c0_65 = arith.constant 0 : index
    %140 = vector.load %arg6[%c0_63, %c0_64, %c0_65] : memref<2x32x128xbf16, #tpu.memory_space<vmem>>, vector<1x32x128xbf16>
    %141 = vector.shape_cast %140 : vector<1x32x128xbf16> to vector<32x128xbf16>
    %cst_66 = arith.constant dense<0.000000e+00> : vector<32x128xf32>
    %142 = tpu.matmul %139, %141, %cst_66 {dimension_numbers = #tpu.dot_dimension_numbers<[1], [0], [0], [1], [0, 0, 1, 1], [], []>} : vector<32x32xbf16>, vector<32x128xbf16>, vector<32x128xf32> -> vector<32x128xf32>
    %143 = vector.broadcast %10 : vector<1x128xf32> to vector<32x128xf32>
    %144 = arith.addf %142, %143 : vector<32x128xf32>
    %cst_67 = arith.constant 5.000000e-01 : f32
    %145 = vector.broadcast %cst_67 : f32 to vector<32x128xf32>
    %146 = arith.mulf %145, %144 : vector<32x128xf32>
    %cst_68 = arith.constant 4.471500e-02 : f32
    %147 = vector.broadcast %cst_68 : f32 to vector<32x128xf32>
    %148 = arith.mulf %147, %144 : vector<32x128xf32>
    %149 = arith.mulf %148, %144 : vector<32x128xf32>
    %150 = arith.mulf %149, %144 : vector<32x128xf32>
    %151 = arith.addf %144, %150 : vector<32x128xf32>
    %cst_69 = arith.constant 0.797884583 : f32
    %152 = vector.broadcast %cst_69 : f32 to vector<32x128xf32>
    %153 = arith.mulf %152, %151 : vector<32x128xf32>
    %154 = math.tanh %153 : vector<32x128xf32>
    %cst_70 = arith.constant 1.000000e+00 : f32
    %155 = vector.broadcast %cst_70 : f32 to vector<32x128xf32>
    %156 = arith.addf %155, %154 : vector<32x128xf32>
    %157 = arith.mulf %146, %156 : vector<32x128xf32>
    %158 = arith.truncf %157 : vector<32x128xf32> to vector<32x128xbf16>
    %c0_71 = arith.constant 0 : index
    %c0_72 = arith.constant 0 : index
    %c0_73 = arith.constant 0 : index
    %159 = vector.load %arg7[%c0_71, %c0_72, %c0_73] : memref<2x128x32xbf16, #tpu.memory_space<vmem>>, vector<1x128x32xbf16>
    %160 = vector.shape_cast %159 : vector<1x128x32xbf16> to vector<128x32xbf16>
    %cst_74 = arith.constant dense<0.000000e+00> : vector<32x32xf32>
    %161 = tpu.matmul %158, %160, %cst_74 {dimension_numbers = #tpu.dot_dimension_numbers<[1], [0], [0], [1], [0, 0, 1, 1], [], []>} : vector<32x128xbf16>, vector<128x32xbf16>, vector<32x32xf32> -> vector<32x32xf32>
    %162 = vector.broadcast %11 : vector<1x32xf32> to vector<32x32xf32>
    %163 = arith.addf %161, %162 : vector<32x32xf32>
    %164 = arith.addf %118, %163 : vector<32x32xf32>
    %c1_75 = arith.constant 1 : index
    %c0_76 = arith.constant 0 : index
    %c0_77 = arith.constant 0 : index
    %165 = vector.load %arg1[%c1_75, %c0_76, %c0_77] : memref<2x16x128xf32, #tpu.memory_space<vmem>>, vector<1x16x128xf32>
    %166 = vector.shape_cast %165 : vector<1x16x128xf32> to vector<16x128xf32>
    %167 = vector.extract_strided_slice %166 {offsets = [0, 0], sizes = [1, 32], strides = [1, 1]} : vector<16x128xf32> to vector<1x32xf32>
    %168 = vector.extract_strided_slice %166 {offsets = [1, 0], sizes = [1, 32], strides = [1, 1]} : vector<16x128xf32> to vector<1x32xf32>
    %169 = vector.extract_strided_slice %166 {offsets = [2, 0], sizes = [1, 96], strides = [1, 1]} : vector<16x128xf32> to vector<1x96xf32>
    %170 = vector.extract_strided_slice %166 {offsets = [3, 0], sizes = [1, 32], strides = [1, 1]} : vector<16x128xf32> to vector<1x32xf32>
    %171 = vector.extract_strided_slice %166 {offsets = [4, 0], sizes = [1, 32], strides = [1, 1]} : vector<16x128xf32> to vector<1x32xf32>
    %172 = vector.extract_strided_slice %166 {offsets = [5, 0], sizes = [1, 32], strides = [1, 1]} : vector<16x128xf32> to vector<1x32xf32>
    %173 = vector.extract_strided_slice %166 {offsets = [6, 0], sizes = [1, 32], strides = [1, 1]} : vector<16x128xf32> to vector<1x32xf32>
    %174 = vector.extract_strided_slice %166 {offsets = [7, 0], sizes = [1, 128], strides = [1, 1]} : vector<16x128xf32> to vector<1x128xf32>
    %175 = vector.extract_strided_slice %166 {offsets = [8, 0], sizes = [1, 32], strides = [1, 1]} : vector<16x128xf32> to vector<1x32xf32>
    %cst_78 = arith.constant dense<0.000000e+00> : vector<32xf32>
    %176 = vector.multi_reduction <add>, %164, %cst_78 [1] : vector<32x32xf32> to vector<32xf32>
    %177 = vector.shape_cast %176 : vector<32xf32> to vector<32x1xf32>
    %cst_79 = arith.constant 3.200000e+01 : f32
    %178 = vector.broadcast %cst_79 : f32 to vector<32x1xf32>
    %179 = arith.divf %177, %178 : vector<32x1xf32>
    %180 = vector.broadcast %179 : vector<32x1xf32> to vector<32x32xf32>
    %181 = arith.subf %164, %180 : vector<32x32xf32>
    %182 = arith.mulf %181, %181 : vector<32x32xf32>
    %cst_80 = arith.constant dense<0.000000e+00> : vector<32xf32>
    %183 = vector.multi_reduction <add>, %182, %cst_80 [1] : vector<32x32xf32> to vector<32xf32>
    %184 = vector.shape_cast %183 : vector<32xf32> to vector<32x1xf32>
    %cst_81 = arith.constant 3.200000e+01 : f32
    %185 = vector.broadcast %cst_81 : f32 to vector<32x1xf32>
    %186 = arith.divf %184, %185 : vector<32x1xf32>
    %cst_82 = arith.constant 9.99999974E-6 : f32
    %187 = vector.broadcast %cst_82 : f32 to vector<32x1xf32>
    %188 = arith.addf %186, %187 : vector<32x1xf32>
    %189 = math.rsqrt %188 : vector<32x1xf32>
    %190 = vector.broadcast %189 : vector<32x1xf32> to vector<32x32xf32>
    %191 = arith.mulf %181, %190 : vector<32x32xf32>
    %192 = vector.broadcast %167 : vector<1x32xf32> to vector<32x32xf32>
    %193 = arith.mulf %191, %192 : vector<32x32xf32>
    %194 = vector.broadcast %168 : vector<1x32xf32> to vector<32x32xf32>
    %195 = arith.addf %193, %194 : vector<32x32xf32>
    %196 = arith.truncf %195 : vector<32x32xf32> to vector<32x32xbf16>
    %c1_83 = arith.constant 1 : index
    %c0_84 = arith.constant 0 : index
    %c0_85 = arith.constant 0 : index
    %197 = vector.load %arg2[%c1_83, %c0_84, %c0_85] : memref<2x32x96xbf16, #tpu.memory_space<vmem>>, vector<1x32x96xbf16>
    %198 = vector.shape_cast %197 : vector<1x32x96xbf16> to vector<32x96xbf16>
    %cst_86 = arith.constant dense<0.000000e+00> : vector<32x96xf32>
    %199 = tpu.matmul %196, %198, %cst_86 {dimension_numbers = #tpu.dot_dimension_numbers<[1], [0], [0], [1], [0, 0, 1, 1], [], []>} : vector<32x32xbf16>, vector<32x96xbf16>, vector<32x96xf32> -> vector<32x96xf32>
    %200 = vector.broadcast %169 : vector<1x96xf32> to vector<32x96xf32>
    %201 = arith.addf %199, %200 : vector<32x96xf32>
    %202 = vector.extract_strided_slice %201 {offsets = [0, 0], sizes = [32, 32], strides = [1, 1]} : vector<32x96xf32> to vector<32x32xf32>
    %203 = vector.extract_strided_slice %201 {offsets = [0, 32], sizes = [32, 64], strides = [1, 1]} : vector<32x96xf32> to vector<32x64xf32>
    %c0_87 = arith.constant 0 : index
    %c0_88 = arith.constant 0 : index
    %204 = vector.load %arg9[%c0_87, %c0_88] : memref<128x32xbf16, #tpu.memory_space<vmem>>, vector<128x32xbf16>
    %205 = arith.truncf %203 : vector<32x64xf32> to vector<32x64xbf16>
    %cst_89 = arith.constant dense<0.000000e+00> : vector<128x64xf32>
    %206 = tpu.matmul %204, %205, %cst_89 {dimension_numbers = #tpu.dot_dimension_numbers<[1], [0], [0], [1], [0, 0, 1, 1], [], []>} : vector<128x32xbf16>, vector<32x64xbf16>, vector<128x64xf32> -> vector<128x64xf32>
    %c0_90 = arith.constant 0 : index
    %c0_91 = arith.constant 0 : index
    %207 = vector.load %arg8[%c0_90, %c0_91] : memref<128x32xf32, #tpu.memory_space<vmem>>, vector<128x32xf32>
    %208 = vector.extract_strided_slice %206 {offsets = [0, 0], sizes = [128, 32], strides = [1, 1]} : vector<128x64xf32> to vector<128x32xf32>
    %209 = arith.mulf %208, %207 : vector<128x32xf32>
    %210 = arith.truncf %209 : vector<128x32xf32> to vector<128x32xbf16>
    %211 = vector.extract_strided_slice %206 {offsets = [0, 32], sizes = [128, 32], strides = [1, 1]} : vector<128x64xf32> to vector<128x32xf32>
    %212 = arith.mulf %211, %207 : vector<128x32xf32>
    %213 = arith.truncf %212 : vector<128x32xf32> to vector<128x32xbf16>
    %214 = arith.truncf %202 : vector<32x32xf32> to vector<32x32xbf16>
    %cst_92 = arith.constant dense<0.000000e+00> : vector<32x128xf32>
    %215 = tpu.matmul %214, %210, %cst_92 {dimension_numbers = #tpu.dot_dimension_numbers<[1], [1], [0], [0], [0, 0, 1, 0], [], []>} : vector<32x32xbf16>, vector<128x32xbf16>, vector<32x128xf32> -> vector<32x128xf32>
    %c1_93 = arith.constant 1 : index
    %c0_94 = arith.constant 0 : index
    %c0_95 = arith.constant 0 : index
    %216 = vector.load %arg3[%c1_93, %c0_94, %c0_95] : memref<2x32x128xf32, #tpu.memory_space<vmem>>, vector<1x32x128xf32>
    %217 = vector.shape_cast %216 : vector<1x32x128xf32> to vector<32x128xf32>
    %218 = arith.addf %215, %217 : vector<32x128xf32>
    %cst_96 = arith.constant dense<0xFF800000> : vector<32xf32>
    %219 = vector.multi_reduction <maximumf>, %218, %cst_96 [1] : vector<32x128xf32> to vector<32xf32>
    %220 = vector.shape_cast %219 : vector<32xf32> to vector<32x1xf32>
    %221 = vector.broadcast %220 : vector<32x1xf32> to vector<32x128xf32>
    %222 = arith.subf %218, %221 : vector<32x128xf32>
    %223 = math.exp %222 : vector<32x128xf32>
    %224 = arith.truncf %223 : vector<32x128xf32> to vector<32x128xbf16>
    %c0_97 = arith.constant 0 : index
    %c0_98 = arith.constant 0 : index
    %225 = vector.load %arg10[%c0_97, %c0_98] : memref<128x128xbf16, #tpu.memory_space<vmem>>, vector<128x128xbf16>
    %cst_99 = arith.constant dense<0.000000e+00> : vector<32x128xf32>
    %226 = tpu.matmul %224, %225, %cst_99 {dimension_numbers = #tpu.dot_dimension_numbers<[1], [0], [0], [1], [0, 0, 1, 1], [], []>} : vector<32x128xbf16>, vector<128x128xbf16>, vector<32x128xf32> -> vector<32x128xf32>
    %227 = tpu.reciprocal %226 {approx = true} : vector<32x128xf32> -> vector<32x128xf32>
    %228 = arith.mulf %223, %227 : vector<32x128xf32>
    %229 = arith.truncf %228 : vector<32x128xf32> to vector<32x128xbf16>
    %cst_100 = arith.constant dense<0.000000e+00> : vector<32x32xf32>
    %230 = tpu.matmul %229, %213, %cst_100 {dimension_numbers = #tpu.dot_dimension_numbers<[1], [0], [0], [1], [0, 0, 1, 1], [], []>} : vector<32x128xbf16>, vector<128x32xbf16>, vector<32x32xf32> -> vector<32x32xf32>
    %231 = arith.truncf %230 : vector<32x32xf32> to vector<32x32xbf16>
    %c1_101 = arith.constant 1 : index
    %c0_102 = arith.constant 0 : index
    %c0_103 = arith.constant 0 : index
    %232 = vector.load %arg4[%c1_101, %c0_102, %c0_103] : memref<2x32x32xbf16, #tpu.memory_space<vmem>>, vector<1x32x32xbf16>
    %233 = vector.shape_cast %232 : vector<1x32x32xbf16> to vector<32x32xbf16>
    %cst_104 = arith.constant dense<0.000000e+00> : vector<32x32xf32>
    %234 = tpu.matmul %231, %233, %cst_104 {dimension_numbers = #tpu.dot_dimension_numbers<[1], [0], [0], [1], [0, 0, 1, 1], [], []>} : vector<32x32xbf16>, vector<32x32xbf16>, vector<32x32xf32> -> vector<32x32xf32>
    %235 = arith.addf %164, %234 : vector<32x32xf32>
    %236 = vector.broadcast %170 : vector<1x32xf32> to vector<32x32xf32>
    %237 = arith.addf %235, %236 : vector<32x32xf32>
    %c1_105 = arith.constant 1 : index
    %c4_106 = arith.constant 4 : index
    %c0_107 = arith.constant 0 : index
    %c0_108 = arith.constant 0 : index
    %238 = vector.load %arg5[%c1_105, %c4_106, %c0_107, %c0_108] : memref<2x9x32x32xf32, #tpu.memory_space<vmem>>, vector<1x1x32x32xf32>
    %239 = vector.shape_cast %238 : vector<1x1x32x32xf32> to vector<32x32xf32>
    %240 = arith.mulf %239, %237 : vector<32x32xf32>
    %c1_109 = arith.constant 1 : index
    %c0_110 = arith.constant 0 : index
    %c0_111 = arith.constant 0 : index
    %c0_112 = arith.constant 0 : index
    %241 = vector.load %arg5[%c1_109, %c0_110, %c0_111, %c0_112] : memref<2x9x32x32xf32, #tpu.memory_space<vmem>>, vector<1x1x32x32xf32>
    %242 = vector.shape_cast %241 : vector<1x1x32x32xf32> to vector<32x32xf32>
    %c5_i32_113 = arith.constant 5 : i32
    %243 = tpu.dynamic_rotate %237 by %c5_i32_113 dim 0 : vector<32x32xf32>, i32 -> vector<32x32xf32>
    %244 = arith.mulf %242, %243 : vector<32x32xf32>
    %245 = arith.addf %240, %244 : vector<32x32xf32>
    %c1_114 = arith.constant 1 : index
    %c1_115 = arith.constant 1 : index
    %c0_116 = arith.constant 0 : index
    %c0_117 = arith.constant 0 : index
    %246 = vector.load %arg5[%c1_114, %c1_115, %c0_116, %c0_117] : memref<2x9x32x32xf32, #tpu.memory_space<vmem>>, vector<1x1x32x32xf32>
    %247 = vector.shape_cast %246 : vector<1x1x32x32xf32> to vector<32x32xf32>
    %c4_i32_118 = arith.constant 4 : i32
    %248 = tpu.dynamic_rotate %237 by %c4_i32_118 dim 0 : vector<32x32xf32>, i32 -> vector<32x32xf32>
    %249 = arith.mulf %247, %248 : vector<32x32xf32>
    %250 = arith.addf %245, %249 : vector<32x32xf32>
    %c1_119 = arith.constant 1 : index
    %c2_120 = arith.constant 2 : index
    %c0_121 = arith.constant 0 : index
    %c0_122 = arith.constant 0 : index
    %251 = vector.load %arg5[%c1_119, %c2_120, %c0_121, %c0_122] : memref<2x9x32x32xf32, #tpu.memory_space<vmem>>, vector<1x1x32x32xf32>
    %252 = vector.shape_cast %251 : vector<1x1x32x32xf32> to vector<32x32xf32>
    %c3_i32_123 = arith.constant 3 : i32
    %253 = tpu.dynamic_rotate %237 by %c3_i32_123 dim 0 : vector<32x32xf32>, i32 -> vector<32x32xf32>
    %254 = arith.mulf %252, %253 : vector<32x32xf32>
    %255 = arith.addf %250, %254 : vector<32x32xf32>
    %c1_124 = arith.constant 1 : index
    %c3_125 = arith.constant 3 : index
    %c0_126 = arith.constant 0 : index
    %c0_127 = arith.constant 0 : index
    %256 = vector.load %arg5[%c1_124, %c3_125, %c0_126, %c0_127] : memref<2x9x32x32xf32, #tpu.memory_space<vmem>>, vector<1x1x32x32xf32>
    %257 = vector.shape_cast %256 : vector<1x1x32x32xf32> to vector<32x32xf32>
    %c1_i32_128 = arith.constant 1 : i32
    %258 = tpu.dynamic_rotate %237 by %c1_i32_128 dim 0 : vector<32x32xf32>, i32 -> vector<32x32xf32>
    %259 = arith.mulf %257, %258 : vector<32x32xf32>
    %260 = arith.addf %255, %259 : vector<32x32xf32>
    %c1_129 = arith.constant 1 : index
    %c5_130 = arith.constant 5 : index
    %c0_131 = arith.constant 0 : index
    %c0_132 = arith.constant 0 : index
    %261 = vector.load %arg5[%c1_129, %c5_130, %c0_131, %c0_132] : memref<2x9x32x32xf32, #tpu.memory_space<vmem>>, vector<1x1x32x32xf32>
    %262 = vector.shape_cast %261 : vector<1x1x32x32xf32> to vector<32x32xf32>
    %c31_i32_133 = arith.constant 31 : i32
    %263 = tpu.dynamic_rotate %237 by %c31_i32_133 dim 0 : vector<32x32xf32>, i32 -> vector<32x32xf32>
    %264 = arith.mulf %262, %263 : vector<32x32xf32>
    %265 = arith.addf %260, %264 : vector<32x32xf32>
    %c1_134 = arith.constant 1 : index
    %c6_135 = arith.constant 6 : index
    %c0_136 = arith.constant 0 : index
    %c0_137 = arith.constant 0 : index
    %266 = vector.load %arg5[%c1_134, %c6_135, %c0_136, %c0_137] : memref<2x9x32x32xf32, #tpu.memory_space<vmem>>, vector<1x1x32x32xf32>
    %267 = vector.shape_cast %266 : vector<1x1x32x32xf32> to vector<32x32xf32>
    %c29_i32_138 = arith.constant 29 : i32
    %268 = tpu.dynamic_rotate %237 by %c29_i32_138 dim 0 : vector<32x32xf32>, i32 -> vector<32x32xf32>
    %269 = arith.mulf %267, %268 : vector<32x32xf32>
    %270 = arith.addf %265, %269 : vector<32x32xf32>
    %c1_139 = arith.constant 1 : index
    %c7_140 = arith.constant 7 : index
    %c0_141 = arith.constant 0 : index
    %c0_142 = arith.constant 0 : index
    %271 = vector.load %arg5[%c1_139, %c7_140, %c0_141, %c0_142] : memref<2x9x32x32xf32, #tpu.memory_space<vmem>>, vector<1x1x32x32xf32>
    %272 = vector.shape_cast %271 : vector<1x1x32x32xf32> to vector<32x32xf32>
    %c28_i32_143 = arith.constant 28 : i32
    %273 = tpu.dynamic_rotate %237 by %c28_i32_143 dim 0 : vector<32x32xf32>, i32 -> vector<32x32xf32>
    %274 = arith.mulf %272, %273 : vector<32x32xf32>
    %275 = arith.addf %270, %274 : vector<32x32xf32>
    %c1_144 = arith.constant 1 : index
    %c8_145 = arith.constant 8 : index
    %c0_146 = arith.constant 0 : index
    %c0_147 = arith.constant 0 : index
    %276 = vector.load %arg5[%c1_144, %c8_145, %c0_146, %c0_147] : memref<2x9x32x32xf32, #tpu.memory_space<vmem>>, vector<1x1x32x32xf32>
    %277 = vector.shape_cast %276 : vector<1x1x32x32xf32> to vector<32x32xf32>
    %c27_i32_148 = arith.constant 27 : i32
    %278 = tpu.dynamic_rotate %237 by %c27_i32_148 dim 0 : vector<32x32xf32>, i32 -> vector<32x32xf32>
    %279 = arith.mulf %277, %278 : vector<32x32xf32>
    %280 = arith.addf %275, %279 : vector<32x32xf32>
    %281 = vector.broadcast %171 : vector<1x32xf32> to vector<32x32xf32>
    %282 = arith.addf %280, %281 : vector<32x32xf32>
    %cst_149 = arith.constant dense<0.000000e+00> : vector<32xf32>
    %283 = vector.multi_reduction <add>, %282, %cst_149 [1] : vector<32x32xf32> to vector<32xf32>
    %284 = vector.shape_cast %283 : vector<32xf32> to vector<32x1xf32>
    %cst_150 = arith.constant 3.200000e+01 : f32
    %285 = vector.broadcast %cst_150 : f32 to vector<32x1xf32>
    %286 = arith.divf %284, %285 : vector<32x1xf32>
    %287 = vector.broadcast %286 : vector<32x1xf32> to vector<32x32xf32>
    %288 = arith.subf %282, %287 : vector<32x32xf32>
    %289 = arith.mulf %288, %288 : vector<32x32xf32>
    %cst_151 = arith.constant dense<0.000000e+00> : vector<32xf32>
    %290 = vector.multi_reduction <add>, %289, %cst_151 [1] : vector<32x32xf32> to vector<32xf32>
    %291 = vector.shape_cast %290 : vector<32xf32> to vector<32x1xf32>
    %cst_152 = arith.constant 3.200000e+01 : f32
    %292 = vector.broadcast %cst_152 : f32 to vector<32x1xf32>
    %293 = arith.divf %291, %292 : vector<32x1xf32>
    %cst_153 = arith.constant 9.99999974E-6 : f32
    %294 = vector.broadcast %cst_153 : f32 to vector<32x1xf32>
    %295 = arith.addf %293, %294 : vector<32x1xf32>
    %296 = math.rsqrt %295 : vector<32x1xf32>
    %297 = vector.broadcast %296 : vector<32x1xf32> to vector<32x32xf32>
    %298 = arith.mulf %288, %297 : vector<32x32xf32>
    %299 = vector.broadcast %172 : vector<1x32xf32> to vector<32x32xf32>
    %300 = arith.mulf %298, %299 : vector<32x32xf32>
    %301 = vector.broadcast %173 : vector<1x32xf32> to vector<32x32xf32>
    %302 = arith.addf %300, %301 : vector<32x32xf32>
    %303 = arith.truncf %302 : vector<32x32xf32> to vector<32x32xbf16>
    %c1_154 = arith.constant 1 : index
    %c0_155 = arith.constant 0 : index
    %c0_156 = arith.constant 0 : index
    %304 = vector.load %arg6[%c1_154, %c0_155, %c0_156] : memref<2x32x128xbf16, #tpu.memory_space<vmem>>, vector<1x32x128xbf16>
    %305 = vector.shape_cast %304 : vector<1x32x128xbf16> to vector<32x128xbf16>
    %cst_157 = arith.constant dense<0.000000e+00> : vector<32x128xf32>
    %306 = tpu.matmul %303, %305, %cst_157 {dimension_numbers = #tpu.dot_dimension_numbers<[1], [0], [0], [1], [0, 0, 1, 1], [], []>} : vector<32x32xbf16>, vector<32x128xbf16>, vector<32x128xf32> -> vector<32x128xf32>
    %307 = vector.broadcast %174 : vector<1x128xf32> to vector<32x128xf32>
    %308 = arith.addf %306, %307 : vector<32x128xf32>
    %cst_158 = arith.constant 5.000000e-01 : f32
    %309 = vector.broadcast %cst_158 : f32 to vector<32x128xf32>
    %310 = arith.mulf %309, %308 : vector<32x128xf32>
    %cst_159 = arith.constant 4.471500e-02 : f32
    %311 = vector.broadcast %cst_159 : f32 to vector<32x128xf32>
    %312 = arith.mulf %311, %308 : vector<32x128xf32>
    %313 = arith.mulf %312, %308 : vector<32x128xf32>
    %314 = arith.mulf %313, %308 : vector<32x128xf32>
    %315 = arith.addf %308, %314 : vector<32x128xf32>
    %cst_160 = arith.constant 0.797884583 : f32
    %316 = vector.broadcast %cst_160 : f32 to vector<32x128xf32>
    %317 = arith.mulf %316, %315 : vector<32x128xf32>
    %318 = math.tanh %317 : vector<32x128xf32>
    %cst_161 = arith.constant 1.000000e+00 : f32
    %319 = vector.broadcast %cst_161 : f32 to vector<32x128xf32>
    %320 = arith.addf %319, %318 : vector<32x128xf32>
    %321 = arith.mulf %310, %320 : vector<32x128xf32>
    %322 = arith.truncf %321 : vector<32x128xf32> to vector<32x128xbf16>
    %c1_162 = arith.constant 1 : index
    %c0_163 = arith.constant 0 : index
    %c0_164 = arith.constant 0 : index
    %323 = vector.load %arg7[%c1_162, %c0_163, %c0_164] : memref<2x128x32xbf16, #tpu.memory_space<vmem>>, vector<1x128x32xbf16>
    %324 = vector.shape_cast %323 : vector<1x128x32xbf16> to vector<128x32xbf16>
    %cst_165 = arith.constant dense<0.000000e+00> : vector<32x32xf32>
    %325 = tpu.matmul %322, %324, %cst_165 {dimension_numbers = #tpu.dot_dimension_numbers<[1], [0], [0], [1], [0, 0, 1, 1], [], []>} : vector<32x128xbf16>, vector<128x32xbf16>, vector<32x32xf32> -> vector<32x32xf32>
    %326 = vector.broadcast %175 : vector<1x32xf32> to vector<32x32xf32>
    %327 = arith.addf %325, %326 : vector<32x32xf32>
    %328 = arith.addf %282, %327 : vector<32x32xf32>
    %c0_166 = arith.constant 0 : index
    %c0_167 = arith.constant 0 : index
    %329 = vector.load %arg11[%c0_166, %c0_167] : memref<32x32xf32, #tpu.memory_space<vmem>>, vector<32x32xf32>
    tpu.vector_store %arg11[%c0_166, %c0_167], %328 {strides = array<i32>} : memref<32x32xf32, #tpu.memory_space<vmem>>, vector<32x32xf32>,
    return
  }
}

</mosaic_0001>

<llo_original>
// kernel: tpu_custom_call.1
$region0: #{tpu_custom_call.1}
  #allocation0 [shape = 'u32[]', space=smem, size = 0x4, offset = 0x4, fixed_abs, tag = 'smem constant byte address 0x4 - core index']
  #allocation1 [shape = 'u32[72,128]{1,0:T(1,128)}', space=vmem, size = 0x9000, scoped, tag = 'internal scratch']
  %s0 = inlined_call_operand.vmem [shape: f32[32,32], index: 0, kind: input, shape index: {}]
  %s1 = inlined_call_operand.vmem [shape: f32[2,16,128], index: 1, kind: input, shape index: {}]
  %s2 = inlined_call_operand.vmem [shape: bf16[2,32,96], index: 2, kind: input, shape index: {}]
  %s3 = inlined_call_operand.vmem [shape: f32[2,32,128], index: 3, kind: input, shape index: {}]
  %s4 = inlined_call_operand.vmem [shape: bf16[2,32,32], index: 4, kind: input, shape index: {}]
  %s5 = inlined_call_operand.hbm [shape: f32[2,9,32,32], index: 5, kind: input, shape index: {}]
  %s6 = inlined_call_operand.vmem [shape: bf16[2,32,128], index: 6, kind: input, shape index: {}]
  %s7 = inlined_call_operand.vmem [shape: bf16[2,128,32], index: 7, kind: input, shape index: {}]
  %s8 = inlined_call_operand.vmem [shape: f32[128,32], index: 8, kind: input, shape index: {}]
  %s9 = inlined_call_operand.vmem [shape: bf16[128,32], index: 9, kind: input, shape index: {}]
  %s10 = inlined_call_operand.vmem [shape: bf16[128,128], index: 10, kind: input, shape index: {}]
  %s11 = inlined_call_operand.hbm [shape: f32[32,32], index: 11, kind: output, shape index: {}]
  %s12 = sld [smem:[#allocation0]]
  $region58: #{tpu_custom_call.1} parent=0
    _
  %s14 = ssub.s32 1, %s12
  %s15 = scalar_select 0, %s14, %s12
  $region1: #{tpu_custom_call.1} parent=0
    #allocation2 [shape = 'u8[294912]{0}', space=vmem, size = 0x48000, scoped, tag = 'input window, operand 5, single buffered']
    #allocation3 [shape = 's32[1]{0}', space=sflag, size = 0x4, scoped, tag = 'scoped memory for tpu_custom_call.1']
    #allocation4 [shape = 's32[1]{0}', space=sflag, size = 0x4, scoped, tag = 'scoped memory for tpu_custom_call.1']
    #allocation5 [shape = 'u8[16384]{0}', space=vmem, size = 0x4000, scoped, tag = 'output window, operand 0, single buffered']
    %16 = vsyncpa [#allocation3], 0
    %17 = vsyncpa [#allocation4], 0
    // Predicated region
    $region2: #{tpu_custom_call.1} parent=1 // pred_check
      _
    $region3: #{tpu_custom_call.1} parent=1 // pred_check_branch
      %19 = sbr.rel (0) target = $region5
    $region4: #{tpu_custom_call.1} parent=1 // pred_region
      _
    $region5: #{tpu_custom_call.1} parent=1 // pred_fallthru
      _
    // Predicated region
    $region6: #{tpu_custom_call.1} parent=1 // pred_check
      _
    $region7: #{tpu_custom_call.1} parent=1 // pred_check_branch
      %21 = sbr.rel (0) target = $region9
    $region8: #{tpu_custom_call.1} parent=1 // pred_region
      _
    $region9: #{tpu_custom_call.1} parent=1 // pred_fallthru
      _
    // Predicated region
    $region10: #{tpu_custom_call.1} parent=1 // pred_check
      _
    $region11: #{tpu_custom_call.1} parent=1 // pred_check_branch
      %23 = sbr.rel (0) target = $region13
    $region12: #{tpu_custom_call.1} parent=1 // pred_region
      _
    $region13: #{tpu_custom_call.1} parent=1 // pred_fallthru
      _
    // Predicated region
    $region14: #{tpu_custom_call.1} parent=1 // pred_check
      _
    $region15: #{tpu_custom_call.1} parent=1 // pred_check_branch
      %25 = sbr.rel (0) target = $region17
    $region16: #{tpu_custom_call.1} parent=1 // pred_region
      _
    $region17: #{tpu_custom_call.1} parent=1 // pred_fallthru
      _
    // Predicated region
    $region18: #{tpu_custom_call.1} parent=1 // pred_check
      _
    $region19: #{tpu_custom_call.1} parent=1 // pred_check_branch
      %27 = sbr.rel (0) target = $region21
    $region20: #{tpu_custom_call.1} parent=1 // pred_region
      _
    $region21: #{tpu_custom_call.1} parent=1 // pred_fallthru
      _
    // Predicated region
    $region22: #{tpu_custom_call.1} parent=1 // pred_check
      _
    $region23: #{tpu_custom_call.1} parent=1 // pred_check_branch
      %29 = sbr.rel (0) target = $region25
    $region24: #{tpu_custom_call.1} parent=1 // pred_region
      %31 = vsyncadd [#allocation3], 0
      %s32 = sshll.u32 %s5, 4
      %s33 = int_to_ptr.hbm [resolvable:$true] %s32
      %s34 = sshll.u32 [#allocation2], 4
      %s35 = int_to_ptr.vmem [resolvable:$true] %s34
      %40 = dma.hbm_to_vmem [thread:$0]  %s33, 9216, %s35, [#allocation3], 128, 128, 8
    $region25: #{tpu_custom_call.1} parent=1 // pred_fallthru
      _
    // Predicated region
    $region26: #{tpu_custom_call.1} parent=1 // pred_check
      _
    $region27: #{tpu_custom_call.1} parent=1 // pred_check_branch
      %42 = sbr.rel (0) target = $region29
    $region28: #{tpu_custom_call.1} parent=1 // pred_region
      _
    $region29: #{tpu_custom_call.1} parent=1 // pred_fallthru
      _
    // Predicated region
    $region30: #{tpu_custom_call.1} parent=1 // pred_check
      _
    $region31: #{tpu_custom_call.1} parent=1 // pred_check_branch
      %44 = sbr.rel (0) target = $region33
    $region32: #{tpu_custom_call.1} parent=1 // pred_region
      _
    $region33: #{tpu_custom_call.1} parent=1 // pred_fallthru
      _
    // Predicated region
    $region34: #{tpu_custom_call.1} parent=1 // pred_check
      _
    $region35: #{tpu_custom_call.1} parent=1 // pred_check_branch
      %46 = sbr.rel (0) target = $region37
    $region36: #{tpu_custom_call.1} parent=1 // pred_region
      _
    $region37: #{tpu_custom_call.1} parent=1 // pred_fallthru
      _
    // Predicated region
    $region38: #{tpu_custom_call.1} parent=1 // pred_check
      _
    $region39: #{tpu_custom_call.1} parent=1 // pred_check_branch
      %48 = sbr.rel (0) target = $region41
    $region40: #{tpu_custom_call.1} parent=1 // pred_region
      _
    $region41: #{tpu_custom_call.1} parent=1 // pred_fallthru
      _
    // Predicated region
    $region42: #{tpu_custom_call.1} parent=1 // pred_check
      _
    $region43: #{tpu_custom_call.1} parent=1 // pred_check_branch
      %50 = sbr.rel (0) target = $region45
    $region44: #{tpu_custom_call.1} parent=1 // pred_region
      _
    $region45: #{tpu_custom_call.1} parent=1 // pred_fallthru
      _
    // Predicated region
    $region46: #{tpu_custom_call.1} parent=1 // pred_check
      _
    $region47: #{tpu_custom_call.1} parent=1 // pred_check_branch
      %52 = sbr.rel (0) target = $region49
    $region48: #{tpu_custom_call.1} parent=1 // pred_region
      %54 = dma.done [#allocation3], 9216
    $region49: #{tpu_custom_call.1} parent=1 // pred_fallthru
      _
    %v56 = vld [vmem:[%s0] sm:$0xff]
    %v57 = vld [vmem:[%s0 + $0x8] sm:$0xff]
    %v58 = vld [vmem:[%s0 + $0x10] sm:$0xff]
    %v59 = vld [vmem:[%s0 + $0x18] sm:$0xff]
    %v60 = vld [vmem:[%s1] sm:$0xff]
    %v61 = vld [vmem:[%s1 + $0x8] sm:$0xff]
    %vm62 = vcmask 261120
    %v63 = vsel %vm62, %v56, 0.0
    %64 = vadd.xlane.f32.xlu0 %v63
    %v65 = vpop.xlane.xlu0 %64
    %v66 = vsel %vm62, %v57, 0.0
    %67 = vadd.xlane.f32.xlu0 %v66
    %v68 = vpop.xlane.xlu0 %67
    %v69 = vsel %vm62, %v58, 0.0
    %70 = vadd.xlane.f32.xlu0 %v69
    %v71 = vpop.xlane.xlu0 %70
    %v72 = vsel %vm62, %v59, 0.0
    %73 = vadd.xlane.f32.xlu0 %v72
    %v74 = vpop.xlane.xlu0 %73
    %v75 = vrcp.pop 32.0
    %v76 = vmul.f32 32.0, %v75
    %v77 = vsub.f32 1.0, %v76
    %v78 = vmul.f32 %v75, %v77
    %v79 = vadd.f32 %v75, %v78
    %vm80 = vweird.f32 %v75
    %v81 = vsel %vm80, %v75, %v79
    %v82 = vmul.f32 %v65, %v81
    %v83 = vmul.f32 %v68, %v81
    %v84 = vmul.f32 %v71, %v81
    %v85 = vmul.f32 %v74, %v81
    %v86 = vsub.f32 %v56, %v82
    %v87 = vsub.f32 %v57, %v83
    %v88 = vsub.f32 %v58, %v84
    %v89 = vsub.f32 %v59, %v85
    %v90 = vmul.f32 %v86, %v86
    %v91 = vmul.f32 %v87, %v87
    %v92 = vmul.f32 %v88, %v88
    %v93 = vmul.f32 %v89, %v89
    %v94 = vsel %vm62, %v90, 0.0
    %95 = vadd.xlane.f32.xlu0 %v94
    %v96 = vpop.xlane.xlu0 %95
    %v97 = vsel %vm62, %v91, 0.0
    %98 = vadd.xlane.f32.xlu0 %v97
    %v99 = vpop.xlane.xlu0 %98
    %v100 = vsel %vm62, %v92, 0.0
    %101 = vadd.xlane.f32.xlu0 %v100
    %v102 = vpop.xlane.xlu0 %101
    %v103 = vsel %vm62, %v93, 0.0
    %104 = vadd.xlane.f32.xlu0 %v103
    %v105 = vpop.xlane.xlu0 %104
    %v106 = vmul.f32 %v96, %v81
    %v107 = vmul.f32 %v99, %v81
    %v108 = vmul.f32 %v102, %v81
    %v109 = vmul.f32 %v105, %v81
    %v110 = vadd.f32 %v106, 1e-05
    %v111 = vadd.f32 %v107, 1e-05
    %v112 = vadd.f32 %v108, 1e-05
    %v113 = vadd.f32 %v109, 1e-05
    %v114 = vrsqrt.pop %v110
    %v115 = vmul.f32 %v114, %v110
    %v116 = vmul.f32 %v115, %v114
    %v117 = vmul.f32 0.5, %v116
    %v118 = vsub.f32 1.5, %v117
    %v119 = vmul.f32 %v114, %v118
    %vm120 = vweird.f32 %v110
    %vm121 = vweird.f32 %v114
    %vm122 = vmor %vm120, %vm121
    %v123 = vsel %vm122, %v114, %v119
    %v124 = vrsqrt.pop %v111
    %v125 = vmul.f32 %v124, %v111
    %v126 = vmul.f32 %v125, %v124
    %v127 = vmul.f32 0.5, %v126
    %v128 = vsub.f32 1.5, %v127
    %v129 = vmul.f32 %v124, %v128
    %vm130 = vweird.f32 %v111
    %vm131 = vweird.f32 %v124
    %vm132 = vmor %vm130, %vm131
    %v133 = vsel %vm132, %v124, %v129
    %v134 = vrsqrt.pop %v112
    %v135 = vmul.f32 %v134, %v112
    %v136 = vmul.f32 %v135, %v134
    %v137 = vmul.f32 0.5, %v136
    %v138 = vsub.f32 1.5, %v137
    %v139 = vmul.f32 %v134, %v138
    %vm140 = vweird.f32 %v112
    %vm141 = vweird.f32 %v134
    %vm142 = vmor %vm140, %vm141
    %v143 = vsel %vm142, %v134, %v139
    %v144 = vrsqrt.pop %v113
    %v145 = vmul.f32 %v144, %v113
    %v146 = vmul.f32 %v145, %v144
    %v147 = vmul.f32 0.5, %v146
    %v148 = vsub.f32 1.5, %v147
    %v149 = vmul.f32 %v144, %v148
    %vm150 = vweird.f32 %v113
    %vm151 = vweird.f32 %v144
    %vm152 = vmor %vm150, %vm151
    %v153 = vsel %vm152, %v144, %v149
    %v154 = vmul.f32 %v86, %v123
    %v155 = vmul.f32 %v87, %v133
    %v156 = vmul.f32 %v88, %v143
    %v157 = vmul.f32 %v89, %v153
    %v158 = vperm.slane %v60, 0
    %v159 = vmul.f32 %v154, %v158
    %v160 = vmul.f32 %v155, %v158
    %v161 = vmul.f32 %v156, %v158
    %v162 = vmul.f32 %v157, %v158
    %v163 = vperm.slane %v60, 1
    %v164 = vadd.f32 %v159, %v163
    %v165 = vadd.f32 %v160, %v163
    %v166 = vadd.f32 %v161, %v163
    %v167 = vadd.f32 %v162, %v163
    %v168 = vpack.c.bf16 %v165, %v164
    %v169 = vpack.c.bf16 %v167, %v166
    %v170 = vld [vmem:[%s2] sm:$0xf]
    %v171 = vld [vmem:[%s2 + $0x4] sm:$0xf]
    %v172 = vld [vmem:[%s2 + $0x8] sm:$0xf]
    %v173 = vld [vmem:[%s2 + $0xc] sm:$0xf]
    %v174 = vperm.slane %v60, 2
    %v179 = vunpack.c.l.b16 %v170
    %v180 = vunpack.c.l.b16 %v171
    %v181 = vunpack.c.l.b16 %v172
    %v182 = vunpack.c.l.b16 %v173
    %v183 = vpack.c.b16 %v180, %v179
    %v184 = vpack.c.b16 %v182, %v181
    %v188 = vsel %vm62, %v168, 0
    %v191 = vsel %vm62, %v169, 0
    %193 = vmatpush.bf16.msra.mxu0 0
    %194 = vmatpush.bf16.msra.mxu0 0
    %195 = vmatpush.bf16.msra.mxu0 0
    %196 = vmatpush.bf16.msra.mxu0 0
    %197 = vmatpush.bf16.msra.mxu0 0
    %198 = vmatpush.bf16.msra.mxu0 0
    %199 = vmatpush.bf16.msra.mxu0 %v184
    %200 = vmatpush.bf16.msra.mxu0 %v183
    %201 = vmatmul.bf16.gmra.mxu0 %v188
    %v202 = vpop.f32.mrf.mxu0
    %v203 = vadd.f32 %v174, %v202
    %v204 = vpop.f32.mrf.mxu0
    %v205 = vadd.f32 %v174, %v204
    %206 = vmatmul.bf16.gmra.mxu0 %v191
    %v207 = vpop.f32.mrf.mxu0
    %v208 = vadd.f32 %v174, %v207
    %v209 = vpop.f32.mrf.mxu0
    %v210 = vadd.f32 %v174, %v209
    %211 = vdwg.mxu0
    %v212 = vld [vmem:[%s9] sm:$0xf]
    %v213 = vld [vmem:[%s9 + $0x4] sm:$0xf]
    %v214 = vld [vmem:[%s9 + $0x8] sm:$0xf]
    %v215 = vld [vmem:[%s9 + $0xc] sm:$0xf]
    %v216 = vld [vmem:[%s9 + $0x10] sm:$0xf]
    %v217 = vld [vmem:[%s9 + $0x14] sm:$0xf]
    %v218 = vld [vmem:[%s9 + $0x18] sm:$0xf]
    %v219 = vld [vmem:[%s9 + $0x1c] sm:$0xf]
    %v220 = vld [vmem:[%s9 + $0x20] sm:$0xf]
    %v221 = vld [vmem:[%s9 + $0x24] sm:$0xf]
    %v222 = vld [vmem:[%s9 + $0x28] sm:$0xf]
    %v223 = vld [vmem:[%s9 + $0x2c] sm:$0xf]
    %v224 = vld [vmem:[%s9 + $0x30] sm:$0xf]
    %v225 = vld [vmem:[%s9 + $0x34] sm:$0xf]
    %v226 = vld [vmem:[%s9 + $0x38] sm:$0xf]
    %v227 = vld [vmem:[%s9 + $0x3c] sm:$0xf]
    %v228 = vpack.c.bf16 %v205, %v203
    %v229 = vpack.c.bf16 %v210, %v208
    %v246 = vunpack.c.l.b16 %v212
    %v247 = vunpack.c.l.b16 %v213
    %v248 = vunpack.c.l.b16 %v214
    %v249 = vunpack.c.l.b16 %v215
    %v250 = vunpack.c.l.b16 %v216
    %v251 = vunpack.c.l.b16 %v217
    %v252 = vunpack.c.l.b16 %v218
    %v253 = vunpack.c.l.b16 %v219
    %v254 = vunpack.c.l.b16 %v220
    %v255 = vunpack.c.l.b16 %v221
    %v256 = vunpack.c.l.b16 %v222
    %v257 = vunpack.c.l.b16 %v223
    %v258 = vunpack.c.l.b16 %v224
    %v259 = vunpack.c.l.b16 %v225
    %v260 = vunpack.c.l.b16 %v226
    %v261 = vunpack.c.l.b16 %v227
    %v262 = vpack.c.b16 %v247, %v246
    %v263 = vpack.c.b16 %v249, %v248
    %v264 = vpack.c.b16 %v251, %v250
    %v265 = vpack.c.b16 %v253, %v252
    %v266 = vpack.c.b16 %v255, %v254
    %v267 = vpack.c.b16 %v257, %v256
    %v268 = vpack.c.b16 %v259, %v258
    %v269 = vpack.c.b16 %v261, %v260
    %272 = vrot.lane.b32.xlu0 %v228, 96
    %v273 = vpop.permute.xlu0 %272
    %274 = vrot.lane.b32.xlu0 %v229, 96
    %v275 = vpop.permute.xlu0 %274
    %v279 = vsel %vm62, %v262, 0
    %v282 = vsel %vm62, %v263, 0
    %v285 = vsel %vm62, %v264, 0
    %v288 = vsel %vm62, %v265, 0
    %v291 = vsel %vm62, %v266, 0
    %v294 = vsel %vm62, %v267, 0
    %v297 = vsel %vm62, %v268, 0
    %v300 = vsel %vm62, %v269, 0
    %302 = vmatpush.bf16.msra.mxu0 0
    %303 = vmatpush.bf16.msra.mxu0 0
    %304 = vmatpush.bf16.msra.mxu0 0
    %305 = vmatpush.bf16.msra.mxu0 0
    %306 = vmatpush.bf16.msra.mxu0 0
    %307 = vmatpush.bf16.msra.mxu0 0
    %308 = vmatpush.bf16.msra.mxu0 %v275
    %309 = vmatpush.bf16.msra.mxu0 %v273
    %310 = vmatmul.bf16.gmra.mxu0 %v279
    %v311 = vpop.f32.mrf.mxu0
    %v312 = vadd.f32 0.0, %v311
    %v313 = vpop.f32.mrf.mxu0
    %v314 = vadd.f32 0.0, %v313
    %315 = vmatmul.bf16.gmra.mxu0 %v282
    %v316 = vpop.f32.mrf.mxu0
    %v317 = vadd.f32 0.0, %v316
    %v318 = vpop.f32.mrf.mxu0
    %v319 = vadd.f32 0.0, %v318
    %320 = vmatmul.bf16.gmra.mxu0 %v285
    %v321 = vpop.f32.mrf.mxu0
    %v322 = vadd.f32 0.0, %v321
    %v323 = vpop.f32.mrf.mxu0
    %v324 = vadd.f32 0.0, %v323
    %325 = vmatmul.bf16.gmra.mxu0 %v288
    %v326 = vpop.f32.mrf.mxu0
    %v327 = vadd.f32 0.0, %v326
    %v328 = vpop.f32.mrf.mxu0
    %v329 = vadd.f32 0.0, %v328
    %330 = vmatmul.bf16.gmra.mxu0 %v291
    %v331 = vpop.f32.mrf.mxu0
    %v332 = vadd.f32 0.0, %v331
    %v333 = vpop.f32.mrf.mxu0
    %v334 = vadd.f32 0.0, %v333
    %335 = vmatmul.bf16.gmra.mxu0 %v294
    %v336 = vpop.f32.mrf.mxu0
    %v337 = vadd.f32 0.0, %v336
    %v338 = vpop.f32.mrf.mxu0
    %v339 = vadd.f32 0.0, %v338
    %340 = vmatmul.bf16.gmra.mxu0 %v297
    %v341 = vpop.f32.mrf.mxu0
    %v342 = vadd.f32 0.0, %v341
    %v343 = vpop.f32.mrf.mxu0
    %v344 = vadd.f32 0.0, %v343
    %345 = vmatmul.bf16.gmra.mxu0 %v300
    %v346 = vpop.f32.mrf.mxu0
    %v347 = vadd.f32 0.0, %v346
    %v348 = vpop.f32.mrf.mxu0
    %v349 = vadd.f32 0.0, %v348
    %350 = vdwg.mxu0
    %v351 = vld [vmem:[%s8] sm:$0xff]
    %v352 = vld [vmem:[%s8 + $0x8] sm:$0xff]
    %v353 = vld [vmem:[%s8 + $0x10] sm:$0xff]
    %v354 = vld [vmem:[%s8 + $0x18] sm:$0xff]
    %v355 = vld [vmem:[%s8 + $0x20] sm:$0xff]
    %v356 = vld [vmem:[%s8 + $0x28] sm:$0xff]
    %v357 = vld [vmem:[%s8 + $0x30] sm:$0xff]
    %v358 = vld [vmem:[%s8 + $0x38] sm:$0xff]
    %v359 = vld [vmem:[%s8 + $0x40] sm:$0xff]
    %v360 = vld [vmem:[%s8 + $0x48] sm:$0xff]
    %v361 = vld [vmem:[%s8 + $0x50] sm:$0xff]
    %v362 = vld [vmem:[%s8 + $0x58] sm:$0xff]
    %v363 = vld [vmem:[%s8 + $0x60] sm:$0xff]
    %v364 = vld [vmem:[%s8 + $0x68] sm:$0xff]
    %v365 = vld [vmem:[%s8 + $0x70] sm:$0xff]
    %v366 = vld [vmem:[%s8 + $0x78] sm:$0xff]
    %v367 = vmul.f32 %v312, %v351
    %v368 = vmul.f32 %v314, %v352
    %v369 = vmul.f32 %v317, %v353
    %v370 = vmul.f32 %v319, %v354
    %v371 = vmul.f32 %v322, %v355
    %v372 = vmul.f32 %v324, %v356
    %v373 = vmul.f32 %v327, %v357
    %v374 = vmul.f32 %v329, %v358
    %v375 = vmul.f32 %v332, %v359
    %v376 = vmul.f32 %v334, %v360
    %v377 = vmul.f32 %v337, %v361
    %v378 = vmul.f32 %v339, %v362
    %v379 = vmul.f32 %v342, %v363
    %v380 = vmul.f32 %v344, %v364
    %v381 = vmul.f32 %v347, %v365
    %v382 = vmul.f32 %v349, %v366
    %v383 = vpack.c.bf16 %v368, %v367
    %v384 = vpack.c.bf16 %v370, %v369
    %v385 = vpack.c.bf16 %v372, %v371
    %v386 = vpack.c.bf16 %v374, %v373
    %v387 = vpack.c.bf16 %v376, %v375
    %v388 = vpack.c.bf16 %v378, %v377
    %v389 = vpack.c.bf16 %v380, %v379
    %v390 = vpack.c.bf16 %v382, %v381
    %407 = vrot.lane.b32.xlu0 %v351, 32
    %v408 = vpop.permute.xlu0 %407
    %409 = vrot.lane.b32.xlu0 %v352, 32
    %v410 = vpop.permute.xlu0 %409
    %411 = vrot.lane.b32.xlu0 %v353, 32
    %v412 = vpop.permute.xlu0 %411
    %413 = vrot.lane.b32.xlu0 %v354, 32
    %v414 = vpop.permute.xlu0 %413
    %415 = vrot.lane.b32.xlu0 %v355, 32
    %v416 = vpop.permute.xlu0 %415
    %417 = vrot.lane.b32.xlu0 %v356, 32
    %v418 = vpop.permute.xlu0 %417
    %419 = vrot.lane.b32.xlu0 %v357, 32
    %v420 = vpop.permute.xlu0 %419
    %421 = vrot.lane.b32.xlu0 %v358, 32
    %v422 = vpop.permute.xlu0 %421
    %423 = vrot.lane.b32.xlu0 %v359, 32
    %v424 = vpop.permute.xlu0 %423
    %425 = vrot.lane.b32.xlu0 %v360, 32
    %v426 = vpop.permute.xlu0 %425
    %427 = vrot.lane.b32.xlu0 %v361, 32
    %v428 = vpop.permute.xlu0 %427
    %429 = vrot.lane.b32.xlu0 %v362, 32
    %v430 = vpop.permute.xlu0 %429
    %431 = vrot.lane.b32.xlu0 %v363, 32
    %v432 = vpop.permute.xlu0 %431
    %433 = vrot.lane.b32.xlu0 %v364, 32
    %v434 = vpop.permute.xlu0 %433
    %435 = vrot.lane.b32.xlu0 %v365, 32
    %v436 = vpop.permute.xlu0 %435
    %437 = vrot.lane.b32.xlu0 %v366, 32
    %v438 = vpop.permute.xlu0 %437
    %v455 = vmul.f32 %v312, %v408
    %v456 = vmul.f32 %v314, %v410
    %v457 = vmul.f32 %v317, %v412
    %v458 = vmul.f32 %v319, %v414
    %v459 = vmul.f32 %v322, %v416
    %v460 = vmul.f32 %v324, %v418
    %v461 = vmul.f32 %v327, %v420
    %v462 = vmul.f32 %v329, %v422
    %v463 = vmul.f32 %v332, %v424
    %v464 = vmul.f32 %v334, %v426
    %v465 = vmul.f32 %v337, %v428
    %v466 = vmul.f32 %v339, %v430
    %v467 = vmul.f32 %v342, %v432
    %v468 = vmul.f32 %v344, %v434
    %v469 = vmul.f32 %v347, %v436
    %v470 = vmul.f32 %v349, %v438
    %v471 = vpack.c.bf16 %v456, %v455
    %v472 = vpack.c.bf16 %v458, %v457
    %v473 = vpack.c.bf16 %v460, %v459
    %v474 = vpack.c.bf16 %v462, %v461
    %v475 = vpack.c.bf16 %v464, %v463
    %v476 = vpack.c.bf16 %v466, %v465
    %v477 = vpack.c.bf16 %v468, %v467
    %v478 = vpack.c.bf16 %v470, %v469
    %v479 = vld [vmem:[%s3] sm:$0xff]
    %v480 = vld [vmem:[%s3 + $0x8] sm:$0xff]
    %v481 = vld [vmem:[%s3 + $0x10] sm:$0xff]
    %v482 = vld [vmem:[%s3 + $0x18] sm:$0xff]
    %v484 = vsel %vm62, %v228, 0
    %v487 = vsel %vm62, %v229, 0
    %v490 = vsel %vm62, %v383, 0
    %v493 = vsel %vm62, %v384, 0
    %v496 = vsel %vm62, %v385, 0
    %v499 = vsel %vm62, %v386, 0
    %v502 = vsel %vm62, %v387, 0
    %v505 = vsel %vm62, %v388, 0
    %v508 = vsel %vm62, %v389, 0
    %v511 = vsel %vm62, %v390, 0
    %513 = vmatpush.bf16.xpose.msra.mxu0 %v511
    %514 = vmatpush.bf16.xpose.msra.mxu0 %v508
    %515 = vmatpush.bf16.xpose.msra.mxu0 %v505
    %516 = vmatpush.bf16.xpose.msra.mxu0 %v502
    %517 = vmatpush.bf16.xpose.msra.mxu0 %v499
    %518 = vmatpush.bf16.xpose.msra.mxu0 %v496
    %519 = vmatpush.bf16.xpose.msra.mxu0 %v493
    %520 = vmatpush.bf16.xpose.msra.mxu0 %v490
    %521 = vmatmul.bf16.gmra.mxu0 %v484
    %v522 = vpop.f32.mrf.mxu0
    %v523 = vadd.f32 %v479, %v522
    %v524 = vpop.f32.mrf.mxu0
    %v525 = vadd.f32 %v480, %v524
    %526 = vmatmul.bf16.gmra.mxu0 %v487
    %v527 = vpop.f32.mrf.mxu0
    %v528 = vadd.f32 %v481, %v527
    %v529 = vpop.f32.mrf.mxu0
    %v530 = vadd.f32 %v482, %v529
    %531 = vdwg.mxu0
    %532 = vmax.xlane.f32.xlu0 %v523
    %v533 = vpop.xlane.xlu0 %532
    %534 = vmax.xlane.f32.xlu0 %v525
    %v535 = vpop.xlane.xlu0 %534
    %536 = vmax.xlane.f32.xlu0 %v528
    %v537 = vpop.xlane.xlu0 %536
    %538 = vmax.xlane.f32.xlu0 %v530
    %v539 = vpop.xlane.xlu0 %538
    %v540 = vsub.f32 %v523, %v533
    %v541 = vsub.f32 %v525, %v535
    %v542 = vsub.f32 %v528, %v537
    %v543 = vsub.f32 %v530, %v539
    %v544 = vmul.f32 %v540, 1.442695
    %v545 = vpow.pop %v544
    %v546 = vmul.f32 %v541, 1.442695
    %v547 = vpow.pop %v546
    %v548 = vmul.f32 %v542, 1.442695
    %v549 = vpow.pop %v548
    %v550 = vmul.f32 %v543, 1.442695
    %v551 = vpow.pop %v550
    %v552 = vpack.c.bf16 %v547, %v545
    %v553 = vpack.c.bf16 %v551, %v549
    %v554 = vld [vmem:[%s10] sm:$0xf]
    %v555 = vld [vmem:[%s10 + $0x4] sm:$0xf]
    %v556 = vld [vmem:[%s10 + $0x8] sm:$0xf]
    %v557 = vld [vmem:[%s10 + $0xc] sm:$0xf]
    %v558 = vld [vmem:[%s10 + $0x10] sm:$0xf]
    %v559 = vld [vmem:[%s10 + $0x14] sm:$0xf]
    %v560 = vld [vmem:[%s10 + $0x18] sm:$0xf]
    %v561 = vld [vmem:[%s10 + $0x1c] sm:$0xf]
    %v562 = vld [vmem:[%s10 + $0x20] sm:$0xf]
    %v563 = vld [vmem:[%s10 + $0x24] sm:$0xf]
    %v564 = vld [vmem:[%s10 + $0x28] sm:$0xf]
    %v565 = vld [vmem:[%s10 + $0x2c] sm:$0xf]
    %v566 = vld [vmem:[%s10 + $0x30] sm:$0xf]
    %v567 = vld [vmem:[%s10 + $0x34] sm:$0xf]
    %v568 = vld [vmem:[%s10 + $0x38] sm:$0xf]
    %v569 = vld [vmem:[%s10 + $0x3c] sm:$0xf]
    %v586 = vunpack.c.l.b16 %v554
    %v587 = vunpack.c.l.b16 %v555
    %v588 = vunpack.c.l.b16 %v556
    %v589 = vunpack.c.l.b16 %v557
    %v590 = vunpack.c.l.b16 %v558
    %v591 = vunpack.c.l.b16 %v559
    %v592 = vunpack.c.l.b16 %v560
    %v593 = vunpack.c.l.b16 %v561
    %v594 = vunpack.c.l.b16 %v562
    %v595 = vunpack.c.l.b16 %v563
    %v596 = vunpack.c.l.b16 %v564
    %v597 = vunpack.c.l.b16 %v565
    %v598 = vunpack.c.l.b16 %v566
    %v599 = vunpack.c.l.b16 %v567
    %v600 = vunpack.c.l.b16 %v568
    %v601 = vunpack.c.l.b16 %v569
    %v602 = vpack.c.b16 %v587, %v586
    %v603 = vpack.c.b16 %v589, %v588
    %v604 = vpack.c.b16 %v591, %v590
    %v605 = vpack.c.b16 %v593, %v592
    %v606 = vpack.c.b16 %v595, %v594
    %v607 = vpack.c.b16 %v597, %v596
    %v608 = vpack.c.b16 %v599, %v598
    %v609 = vpack.c.b16 %v601, %v600
    %618 = vmatpush.bf16.msra.mxu0 %v609
    %619 = vmatpush.bf16.msra.mxu0 %v608
    %620 = vmatpush.bf16.msra.mxu0 %v607
    %621 = vmatpush.bf16.msra.mxu0 %v606
    %622 = vmatpush.bf16.msra.mxu0 %v605
    %623 = vmatpush.bf16.msra.mxu0 %v604
    %624 = vmatpush.bf16.msra.mxu0 %v603
    %625 = vmatpush.bf16.msra.mxu0 %v602
    %626 = vmatmul.bf16.gmra.mxu0 %v552
    %v627 = vpop.f32.mrf.mxu0
    %v628 = vadd.f32 0.0, %v627
    %v629 = vpop.f32.mrf.mxu0
    %v630 = vadd.f32 0.0, %v629
    %631 = vmatmul.bf16.gmra.mxu0 %v553
    %v632 = vpop.f32.mrf.mxu0
    %v633 = vadd.f32 0.0, %v632
    %v634 = vpop.f32.mrf.mxu0
    %v635 = vadd.f32 0.0, %v634
    %636 = vdwg.mxu0
    %v637 = vrcp.pop %v628
    %v638 = vrcp.pop %v630
    %v639 = vrcp.pop %v633
    %v640 = vrcp.pop %v635
    %v641 = vmul.f32 %v545, %v637
    %v642 = vmul.f32 %v547, %v638
    %v643 = vmul.f32 %v549, %v639
    %v644 = vmul.f32 %v551, %v640
    %v645 = vpack.c.bf16 %v642, %v641
    %v646 = vpack.c.bf16 %v644, %v643
    %655 = vrot.lane.b32.xlu0 %v471, 96
    %v656 = vpop.permute.xlu0 %655
    %657 = vrot.lane.b32.xlu0 %v472, 96
    %v658 = vpop.permute.xlu0 %657
    %659 = vrot.lane.b32.xlu0 %v473, 96
    %v660 = vpop.permute.xlu0 %659
    %661 = vrot.lane.b32.xlu0 %v474, 96
    %v662 = vpop.permute.xlu0 %661
    %663 = vrot.lane.b32.xlu0 %v475, 96
    %v664 = vpop.permute.xlu0 %663
    %665 = vrot.lane.b32.xlu0 %v476, 96
    %v666 = vpop.permute.xlu0 %665
    %667 = vrot.lane.b32.xlu0 %v477, 96
    %v668 = vpop.permute.xlu0 %667
    %669 = vrot.lane.b32.xlu0 %v478, 96
    %v670 = vpop.permute.xlu0 %669
    %679 = vmatpush.bf16.msra.mxu0 %v670
    %680 = vmatpush.bf16.msra.mxu0 %v668
    %681 = vmatpush.bf16.msra.mxu0 %v666
    %682 = vmatpush.bf16.msra.mxu0 %v664
    %683 = vmatpush.bf16.msra.mxu0 %v662
    %684 = vmatpush.bf16.msra.mxu0 %v660
    %685 = vmatpush.bf16.msra.mxu0 %v658
    %686 = vmatpush.bf16.msra.mxu0 %v656
    %687 = vmatmul.bf16.gmra.mxu0 %v645
    %v688 = vpop.f32.mrf.mxu0
    %v689 = vadd.f32 0.0, %v688
    %v690 = vpop.f32.mrf.mxu0
    %v691 = vadd.f32 0.0, %v690
    %692 = vmatmul.bf16.gmra.mxu0 %v646
    %v693 = vpop.f32.mrf.mxu0
    %v694 = vadd.f32 0.0, %v693
    %v695 = vpop.f32.mrf.mxu0
    %v696 = vadd.f32 0.0, %v695
    %697 = vdwg.mxu0
    %v698 = vpack.c.bf16 %v691, %v689
    %v699 = vpack.c.bf16 %v696, %v694
    %v700 = vld [vmem:[%s4] sm:$0xf]
    %v701 = vld [vmem:[%s4 + $0x4] sm:$0xf]
    %v702 = vld [vmem:[%s4 + $0x8] sm:$0xf]
    %v703 = vld [vmem:[%s4 + $0xc] sm:$0xf]
    %v708 = vunpack.c.l.b16 %v700
    %v709 = vunpack.c.l.b16 %v701
    %v710 = vunpack.c.l.b16 %v702
    %v711 = vunpack.c.l.b16 %v703
    %v712 = vpack.c.b16 %v709, %v708
    %v713 = vpack.c.b16 %v711, %v710
    %v717 = vsel %vm62, %v698, 0
    %v720 = vsel %vm62, %v699, 0
    %722 = vmatpush.bf16.msra.mxu0 0
    %723 = vmatpush.bf16.msra.mxu0 0
    %724 = vmatpush.bf16.msra.mxu0 0
    %725 = vmatpush.bf16.msra.mxu0 0
    %726 = vmatpush.bf16.msra.mxu0 0
    %727 = vmatpush.bf16.msra.mxu0 0
    %728 = vmatpush.bf16.msra.mxu0 %v713
    %729 = vmatpush.bf16.msra.mxu0 %v712
    %730 = vmatmul.bf16.gmra.mxu0 %v717
    %v731 = vpop.f32.mrf.mxu0
    %v732 = vadd.f32 0.0, %v731
    %v733 = vpop.f32.mrf.mxu0
    %v734 = vadd.f32 0.0, %v733
    %735 = vmatmul.bf16.gmra.mxu0 %v720
    %v736 = vpop.f32.mrf.mxu0
    %v737 = vadd.f32 0.0, %v736
    %v738 = vpop.f32.mrf.mxu0
    %v739 = vadd.f32 0.0, %v738
    %740 = vdwg.mxu0
    %v741 = vadd.f32 %v56, %v732
    %v742 = vadd.f32 %v57, %v734
    %v743 = vadd.f32 %v58, %v737
    %v744 = vadd.f32 %v59, %v739
    %v745 = vperm.slane %v60, 3
    %v746 = vadd.f32 %v741, %v745
    %v747 = vadd.f32 %v742, %v745
    %v748 = vadd.f32 %v743, %v745
    %v749 = vadd.f32 %v744, %v745
    %s750 = scalar_lea.vmem [#allocation2], 128
    %v751 = vld [vmem:[%s750] sm:$0xff]
    %v752 = vld [vmem:[%s750 + $0x8] sm:$0xff]
    %v753 = vld [vmem:[%s750 + $0x10] sm:$0xff]
    %v754 = vld [vmem:[%s750 + $0x18] sm:$0xff]
    %v755 = vmul.f32 %v751, %v746
    %v756 = vmul.f32 %v752, %v747
    %v757 = vmul.f32 %v753, %v748
    %v758 = vmul.f32 %v754, %v749
    %v759 = vld [vmem:[#allocation2] sm:$0xff]
    %v760 = vld [vmem:[#allocation2 + $0x8] sm:$0xff]
    %v761 = vld [vmem:[#allocation2 + $0x10] sm:$0xff]
    %v762 = vld [vmem:[#allocation2 + $0x18] sm:$0xff]
    %v763 = vrot.slane %v746, 3
    %v764 = vrot.slane %v747, 3
    %v765 = vrot.slane %v748, 3
    %v766 = vrot.slane %v749, 3
    %v767 = vlaneseq
    %v768 = vshrl.u32 %v767, 7
    %vm769 = vcmp.lt.s32.totalorder %v768, 5
    %v770 = vsel %vm769, %v765, %v766
    %v771 = vsel %vm769, %v764, %v765
    %v772 = vsel %vm769, %v763, %v764
    %v773 = vsel %vm769, %v766, %v763
    %v774 = vmul.f32 %v759, %v773
    %v775 = vmul.f32 %v760, %v772
    %v776 = vmul.f32 %v761, %v771
    %v777 = vmul.f32 %v762, %v770
    %v778 = vadd.f32 %v755, %v774
    %v779 = vadd.f32 %v756, %v775
    %v780 = vadd.f32 %v757, %v776
    %v781 = vadd.f32 %v758, %v777
    %s782 = scalar_lea.vmem [#allocation2], 32
    %v783 = vld [vmem:[%s782] sm:$0xff]
    %v784 = vld [vmem:[%s782 + $0x8] sm:$0xff]
    %v785 = vld [vmem:[%s782 + $0x10] sm:$0xff]
    %v786 = vld [vmem:[%s782 + $0x18] sm:$0xff]
    %v787 = vrot.slane %v746, 4
    %v788 = vrot.slane %v747, 4
    %v789 = vrot.slane %v748, 4
    %v790 = vrot.slane %v749, 4
    %vm791 = vcmp.lt.s32.totalorder %v768, 4
    %v792 = vsel %vm791, %v789, %v790
    %v793 = vsel %vm791, %v788, %v789
    %v794 = vsel %vm791, %v787, %v788
    %v795 = vsel %vm791, %v790, %v787
    %v796 = vmul.f32 %v783, %v795
    %v797 = vmul.f32 %v784, %v794
    %v798 = vmul.f32 %v785, %v793
    %v799 = vmul.f32 %v786, %v792
    %v800 = vadd.f32 %v778, %v796
    %v801 = vadd.f32 %v779, %v797
    %v802 = vadd.f32 %v780, %v798
    %v803 = vadd.f32 %v781, %v799
    %s804 = scalar_lea.vmem [#allocation2], 64
    %v805 = vld [vmem:[%s804] sm:$0xff]
    %v806 = vld [vmem:[%s804 + $0x8] sm:$0xff]
    %v807 = vld [vmem:[%s804 + $0x10] sm:$0xff]
    %v808 = vld [vmem:[%s804 + $0x18] sm:$0xff]
    %v809 = vrot.slane %v746, 5
    %v810 = vrot.slane %v747, 5
    %v811 = vrot.slane %v748, 5
    %v812 = vrot.slane %v749, 5
    %vm813 = vcmp.lt.s32.totalorder %v768, 3
    %v814 = vsel %vm813, %v811, %v812
    %v815 = vsel %vm813, %v810, %v811
    %v816 = vsel %vm813, %v809, %v810
    %v817 = vsel %vm813, %v812, %v809
    %v818 = vmul.f32 %v805, %v817
    %v819 = vmul.f32 %v806, %v816
    %v820 = vmul.f32 %v807, %v815
    %v821 = vmul.f32 %v808, %v814
    %v822 = vadd.f32 %v800, %v818
    %v823 = vadd.f32 %v801, %v819
    %v824 = vadd.f32 %v802, %v820
    %v825 = vadd.f32 %v803, %v821
    %s826 = scalar_lea.vmem [#allocation2], 96
    %v827 = vld [vmem:[%s826] sm:$0xff]
    %v828 = vld [vmem:[%s826 + $0x8] sm:$0xff]
    %v829 = vld [vmem:[%s826 + $0x10] sm:$0xff]
    %v830 = vld [vmem:[%s826 + $0x18] sm:$0xff]
    %v831 = vrot.slane %v746, 7
    %v832 = vrot.slane %v747, 7
    %v833 = vrot.slane %v748, 7
    %v834 = vrot.slane %v749, 7
    %vm835 = vcmp.lt.s32.totalorder %v768, 1
    %v836 = vsel %vm835, %v833, %v834
    %v837 = vsel %vm835, %v832, %v833
    %v838 = vsel %vm835, %v831, %v832
    %v839 = vsel %vm835, %v834, %v831
    %v840 = vmul.f32 %v827, %v839
    %v841 = vmul.f32 %v828, %v838
    %v842 = vmul.f32 %v829, %v837
    %v843 = vmul.f32 %v830, %v836
    %v844 = vadd.f32 %v822, %v840
    %v845 = vadd.f32 %v823, %v841
    %v846 = vadd.f32 %v824, %v842
    %v847 = vadd.f32 %v825, %v843
    %s848 = scalar_lea.vmem [#allocation2], 160
    %v849 = vld [vmem:[%s848] sm:$0xff]
    %v850 = vld [vmem:[%s848 + $0x8] sm:$0xff]
    %v851 = vld [vmem:[%s848 + $0x10] sm:$0xff]
    %v852 = vld [vmem:[%s848 + $0x18] sm:$0xff]
    %v853 = vrot.slane %v746, 1
    %v854 = vrot.slane %v747, 1
    %v855 = vrot.slane %v748, 1
    %v856 = vrot.slane %v749, 1
    %vm857 = vcmp.lt.s32.totalorder %v768, 7
    %v858 = vsel %vm857, %v855, %v856
    %v859 = vsel %vm857, %v854, %v855
    %v860 = vsel %vm857, %v853, %v854
    %v861 = vsel %vm857, %v856, %v853
    %v862 = vmul.f32 %v849, %v860
    %v863 = vmul.f32 %v850, %v859
    %v864 = vmul.f32 %v851, %v858
    %v865 = vmul.f32 %v852, %v861
    %v866 = vadd.f32 %v844, %v862
    %v867 = vadd.f32 %v845, %v863
    %v868 = vadd.f32 %v846, %v864
    %v869 = vadd.f32 %v847, %v865
    %s870 = scalar_lea.vmem [#allocation2], 192
    %v871 = vld [vmem:[%s870] sm:$0xff]
    %v872 = vld [vmem:[%s870 + $0x8] sm:$0xff]
    %v873 = vld [vmem:[%s870 + $0x10] sm:$0xff]
    %v874 = vld [vmem:[%s870 + $0x18] sm:$0xff]
    %v875 = vmul.f32 %v871, %v772
    %v876 = vmul.f32 %v872, %v771
    %v877 = vmul.f32 %v873, %v770
    %v878 = vmul.f32 %v874, %v773
    %v879 = vadd.f32 %v866, %v875
    %v880 = vadd.f32 %v867, %v876
    %v881 = vadd.f32 %v868, %v877
    %v882 = vadd.f32 %v869, %v878
    %s883 = scalar_lea.vmem [#allocation2], 224
    %v884 = vld [vmem:[%s883] sm:$0xff]
    %v885 = vld [vmem:[%s883 + $0x8] sm:$0xff]
    %v886 = vld [vmem:[%s883 + $0x10] sm:$0xff]
    %v887 = vld [vmem:[%s883 + $0x18] sm:$0xff]
    %v888 = vmul.f32 %v884, %v794
    %v889 = vmul.f32 %v885, %v793
    %v890 = vmul.f32 %v886, %v792
    %v891 = vmul.f32 %v887, %v795
    %v892 = vadd.f32 %v879, %v888
    %v893 = vadd.f32 %v880, %v889
    %v894 = vadd.f32 %v881, %v890
    %v895 = vadd.f32 %v882, %v891
    %s896 = scalar_lea.vmem [#allocation2], 256
    %v897 = vld [vmem:[%s896] sm:$0xff]
    %v898 = vld [vmem:[%s896 + $0x8] sm:$0xff]
    %v899 = vld [vmem:[%s896 + $0x10] sm:$0xff]
    %v900 = vld [vmem:[%s896 + $0x18] sm:$0xff]
    %v901 = vmul.f32 %v897, %v816
    %v902 = vmul.f32 %v898, %v815
    %v903 = vmul.f32 %v899, %v814
    %v904 = vmul.f32 %v900, %v817
    %v905 = vadd.f32 %v892, %v901
    %v906 = vadd.f32 %v893, %v902
    %v907 = vadd.f32 %v894, %v903
    %v908 = vadd.f32 %v895, %v904
    %v909 = vperm.slane %v60, 4
    %v910 = vadd.f32 %v905, %v909
    %v911 = vadd.f32 %v906, %v909
    %v912 = vadd.f32 %v907, %v909
    %v913 = vadd.f32 %v908, %v909
    %v914 = vsel %vm62, %v910, 0.0
    %915 = vadd.xlane.f32.xlu0 %v914
    %v916 = vpop.xlane.xlu0 %915
    %v917 = vsel %vm62, %v911, 0.0
    %918 = vadd.xlane.f32.xlu0 %v917
    %v919 = vpop.xlane.xlu0 %918
    %v920 = vsel %vm62, %v912, 0.0
    %921 = vadd.xlane.f32.xlu0 %v920
    %v922 = vpop.xlane.xlu0 %921
    %v923 = vsel %vm62, %v913, 0.0
    %924 = vadd.xlane.f32.xlu0 %v923
    %v925 = vpop.xlane.xlu0 %924
    %v926 = vmul.f32 %v916, %v81
    %v927 = vmul.f32 %v919, %v81
    %v928 = vmul.f32 %v922, %v81
    %v929 = vmul.f32 %v925, %v81
    %v930 = vsub.f32 %v910, %v926
    %v931 = vsub.f32 %v911, %v927
    %v932 = vsub.f32 %v912, %v928
    %v933 = vsub.f32 %v913, %v929
    %v934 = vmul.f32 %v930, %v930
    %v935 = vmul.f32 %v931, %v931
    %v936 = vmul.f32 %v932, %v932
    %v937 = vmul.f32 %v933, %v933
    %v938 = vsel %vm62, %v934, 0.0
    %939 = vadd.xlane.f32.xlu0 %v938
    %v940 = vpop.xlane.xlu0 %939
    %v941 = vsel %vm62, %v935, 0.0
    %942 = vadd.xlane.f32.xlu0 %v941
    %v943 = vpop.xlane.xlu0 %942
    %v944 = vsel %vm62, %v936, 0.0
    %945 = vadd.xlane.f32.xlu0 %v944
    %v946 = vpop.xlane.xlu0 %945
    %v947 = vsel %vm62, %v937, 0.0
    %948 = vadd.xlane.f32.xlu0 %v947
    %v949 = vpop.xlane.xlu0 %948
    %v950 = vmul.f32 %v940, %v81
    %v951 = vmul.f32 %v943, %v81
    %v952 = vmul.f32 %v946, %v81
    %v953 = vmul.f32 %v949, %v81
    %v954 = vadd.f32 %v950, 1e-05
    %v955 = vadd.f32 %v951, 1e-05
    %v956 = vadd.f32 %v952, 1e-05
    %v957 = vadd.f32 %v953, 1e-05
    %v958 = vrsqrt.pop %v954
    %v959 = vmul.f32 %v958, %v954
    %v960 = vmul.f32 %v959, %v958
    %v961 = vmul.f32 0.5, %v960
    %v962 = vsub.f32 1.5, %v961
    %v963 = vmul.f32 %v958, %v962
    %vm964 = vweird.f32 %v954
    %vm965 = vweird.f32 %v958
    %vm966 = vmor %vm964, %vm965
    %v967 = vsel %vm966, %v958, %v963
    %v968 = vrsqrt.pop %v955
    %v969 = vmul.f32 %v968, %v955
    %v970 = vmul.f32 %v969, %v968
    %v971 = vmul.f32 0.5, %v970
    %v972 = vsub.f32 1.5, %v971
    %v973 = vmul.f32 %v968, %v972
    %vm974 = vweird.f32 %v955
    %vm975 = vweird.f32 %v968
    %vm976 = vmor %vm974, %vm975
    %v977 = vsel %vm976, %v968, %v973
    %v978 = vrsqrt.pop %v956
    %v979 = vmul.f32 %v978, %v956
    %v980 = vmul.f32 %v979, %v978
    %v981 = vmul.f32 0.5, %v980
    %v982 = vsub.f32 1.5, %v981
    %v983 = vmul.f32 %v978, %v982
    %vm984 = vweird.f32 %v956
    %vm985 = vweird.f32 %v978
    %vm986 = vmor %vm984, %vm985
    %v987 = vsel %vm986, %v978, %v983
    %v988 = vrsqrt.pop %v957
    %v989 = vmul.f32 %v988, %v957
    %v990 = vmul.f32 %v989, %v988
    %v991 = vmul.f32 0.5, %v990
    %v992 = vsub.f32 1.5, %v991
    %v993 = vmul.f32 %v988, %v992
    %vm994 = vweird.f32 %v957
    %vm995 = vweird.f32 %v988
    %vm996 = vmor %vm994, %vm995
    %v997 = vsel %vm996, %v988, %v993
    %v998 = vmul.f32 %v930, %v967
    %v999 = vmul.f32 %v931, %v977
    %v1000 = vmul.f32 %v932, %v987
    %v1001 = vmul.f32 %v933, %v997
    %v1002 = vperm.slane %v60, 5
    %v1003 = vmul.f32 %v998, %v1002
    %v1004 = vmul.f32 %v999, %v1002
    %v1005 = vmul.f32 %v1000, %v1002
    %v1006 = vmul.f32 %v1001, %v1002
    %v1007 = vperm.slane %v60, 6
    %v1008 = vadd.f32 %v1003, %v1007
    %v1009 = vadd.f32 %v1004, %v1007
    %v1010 = vadd.f32 %v1005, %v1007
    %v1011 = vadd.f32 %v1006, %v1007
    %v1012 = vpack.c.bf16 %v1009, %v1008
    %v1013 = vpack.c.bf16 %v1011, %v1010
    %v1014 = vld [vmem:[%s6] sm:$0xf]
    %v1015 = vld [vmem:[%s6 + $0x4] sm:$0xf]
    %v1016 = vld [vmem:[%s6 + $0x8] sm:$0xf]
    %v1017 = vld [vmem:[%s6 + $0xc] sm:$0xf]
    %v1018 = vperm.slane %v60, 7
    %v1023 = vunpack.c.l.b16 %v1014
    %v1024 = vunpack.c.l.b16 %v1015
    %v1025 = vunpack.c.l.b16 %v1016
    %v1026 = vunpack.c.l.b16 %v1017
    %v1027 = vpack.c.b16 %v1024, %v1023
    %v1028 = vpack.c.b16 %v1026, %v1025
    %v1032 = vsel %vm62, %v1012, 0
    %v1035 = vsel %vm62, %v1013, 0
    %1037 = vmatpush.bf16.msra.mxu0 0
    %1038 = vmatpush.bf16.msra.mxu0 0
    %1039 = vmatpush.bf16.msra.mxu0 0
    %1040 = vmatpush.bf16.msra.mxu0 0
    %1041 = vmatpush.bf16.msra.mxu0 0
    %1042 = vmatpush.bf16.msra.mxu0 0
    %1043 = vmatpush.bf16.msra.mxu0 %v1028
    %1044 = vmatpush.bf16.msra.mxu0 %v1027
    %1045 = vmatmul.bf16.gmra.mxu0 %v1032
    %v1046 = vpop.f32.mrf.mxu0
    %v1047 = vadd.f32 %v1018, %v1046
    %v1048 = vpop.f32.mrf.mxu0
    %v1049 = vadd.f32 %v1018, %v1048
    %1050 = vmatmul.bf16.gmra.mxu0 %v1035
    %v1051 = vpop.f32.mrf.mxu0
    %v1052 = vadd.f32 %v1018, %v1051
    %v1053 = vpop.f32.mrf.mxu0
    %v1054 = vadd.f32 %v1018, %v1053
    %1055 = vdwg.mxu0
    %v1056 = vmul.f32 %v1047, 0.5
    %v1057 = vmul.f32 %v1049, 0.5
    %v1058 = vmul.f32 %v1052, 0.5
    %v1059 = vmul.f32 %v1054, 0.5
    %v1060 = vmul.f32 %v1047, 0.044715
    %v1061 = vmul.f32 %v1049, 0.044715
    %v1062 = vmul.f32 %v1052, 0.044715
    %v1063 = vmul.f32 %v1054, 0.044715
    %v1064 = vmul.f32 %v1060, %v1047
    %v1065 = vmul.f32 %v1061, %v1049
    %v1066 = vmul.f32 %v1062, %v1052
    %v1067 = vmul.f32 %v1063, %v1054
    %v1068 = vmul.f32 %v1064, %v1047
    %v1069 = vmul.f32 %v1065, %v1049
    %v1070 = vmul.f32 %v1066, %v1052
    %v1071 = vmul.f32 %v1067, %v1054
    %v1072 = vadd.f32 %v1047, %v1068
    %v1073 = vadd.f32 %v1049, %v1069
    %v1074 = vadd.f32 %v1052, %v1070
    %v1075 = vadd.f32 %v1054, %v1071
    %v1076 = vmul.f32 %v1072, 0.7978846
    %v1077 = vmul.f32 %v1073, 0.7978846
    %v1078 = vmul.f32 %v1074, 0.7978846
    %v1079 = vmul.f32 %v1075, 0.7978846
    %v1080 = vtanh.pop %v1076
    %v1081 = vtanh.pop %v1077
    %v1082 = vtanh.pop %v1078
    %v1083 = vtanh.pop %v1079
    %v1084 = vadd.f32 %v1080, 1.0
    %v1085 = vadd.f32 %v1081, 1.0
    %v1086 = vadd.f32 %v1082, 1.0
    %v1087 = vadd.f32 %v1083, 1.0
    %v1088 = vmul.f32 %v1056, %v1084
    %v1089 = vmul.f32 %v1057, %v1085
    %v1090 = vmul.f32 %v1058, %v1086
    %v1091 = vmul.f32 %v1059, %v1087
    %v1092 = vpack.c.bf16 %v1089, %v1088
    %v1093 = vpack.c.bf16 %v1091, %v1090
    %v1094 = vld [vmem:[%s7] sm:$0xf]
    %v1095 = vld [vmem:[%s7 + $0x4] sm:$0xf]
    %v1096 = vld [vmem:[%s7 + $0x8] sm:$0xf]
    %v1097 = vld [vmem:[%s7 + $0xc] sm:$0xf]
    %v1098 = vld [vmem:[%s7 + $0x10] sm:$0xf]
    %v1099 = vld [vmem:[%s7 + $0x14] sm:$0xf]
    %v1100 = vld [vmem:[%s7 + $0x18] sm:$0xf]
    %v1101 = vld [vmem:[%s7 + $0x1c] sm:$0xf]
    %v1102 = vld [vmem:[%s7 + $0x20] sm:$0xf]
    %v1103 = vld [vmem:[%s7 + $0x24] sm:$0xf]
    %v1104 = vld [vmem:[%s7 + $0x28] sm:$0xf]
    %v1105 = vld [vmem:[%s7 + $0x2c] sm:$0xf]
    %v1106 = vld [vmem:[%s7 + $0x30] sm:$0xf]
    %v1107 = vld [vmem:[%s7 + $0x34] sm:$0xf]
    %v1108 = vld [vmem:[%s7 + $0x38] sm:$0xf]
    %v1109 = vld [vmem:[%s7 + $0x3c] sm:$0xf]
    %v1110 = vperm.slane %v61, 0
    %v1127 = vunpack.c.l.b16 %v1094
    %v1128 = vunpack.c.l.b16 %v1095
    %v1129 = vunpack.c.l.b16 %v1096
    %v1130 = vunpack.c.l.b16 %v1097
    %v1131 = vunpack.c.l.b16 %v1098
    %v1132 = vunpack.c.l.b16 %v1099
    %v1133 = vunpack.c.l.b16 %v1100
    %v1134 = vunpack.c.l.b16 %v1101
    %v1135 = vunpack.c.l.b16 %v1102
    %v1136 = vunpack.c.l.b16 %v1103
    %v1137 = vunpack.c.l.b16 %v1104
    %v1138 = vunpack.c.l.b16 %v1105
    %v1139 = vunpack.c.l.b16 %v1106
    %v1140 = vunpack.c.l.b16 %v1107
    %v1141 = vunpack.c.l.b16 %v1108
    %v1142 = vunpack.c.l.b16 %v1109
    %v1143 = vpack.c.b16 %v1128, %v1127
    %v1144 = vpack.c.b16 %v1130, %v1129
    %v1145 = vpack.c.b16 %v1132, %v1131
    %v1146 = vpack.c.b16 %v1134, %v1133
    %v1147 = vpack.c.b16 %v1136, %v1135
    %v1148 = vpack.c.b16 %v1138, %v1137
    %v1149 = vpack.c.b16 %v1140, %v1139
    %v1150 = vpack.c.b16 %v1142, %v1141
    %1159 = vmatpush.bf16.msra.mxu0 %v1150
    %1160 = vmatpush.bf16.msra.mxu0 %v1149
    %1161 = vmatpush.bf16.msra.mxu0 %v1148
    %1162 = vmatpush.bf16.msra.mxu0 %v1147
    %1163 = vmatpush.bf16.msra.mxu0 %v1146
    %1164 = vmatpush.bf16.msra.mxu0 %v1145
    %1165 = vmatpush.bf16.msra.mxu0 %v1144
    %1166 = vmatpush.bf16.msra.mxu0 %v1143
    %1167 = vmatmul.bf16.gmra.mxu0 %v1092
    %v1168 = vpop.f32.mrf.mxu0
    %v1169 = vadd.f32 %v1110, %v1168
    %v1170 = vpop.f32.mrf.mxu0
    %v1171 = vadd.f32 %v1110, %v1170
    %1172 = vmatmul.bf16.gmra.mxu0 %v1093
    %v1173 = vpop.f32.mrf.mxu0
    %v1174 = vadd.f32 %v1110, %v1173
    %v1175 = vpop.f32.mrf.mxu0
    %v1176 = vadd.f32 %v1110, %v1175
    %1177 = vdwg.mxu0
    %v1178 = vadd.f32 %v910, %v1169
    %v1179 = vadd.f32 %v911, %v1171
    %v1180 = vadd.f32 %v912, %v1174
    %v1181 = vadd.f32 %v913, %v1176
    %s1182 = scalar_lea.vmem %s1, 16
    %v1183 = vld [vmem:[%s1182] sm:$0xff]
    %v1184 = vld [vmem:[%s1182 + $0x8] sm:$0xff]
    %v1185 = vsel %vm62, %v1178, 0.0
    %1186 = vadd.xlane.f32.xlu0 %v1185
    %v1187 = vpop.xlane.xlu0 %1186
    %v1188 = vsel %vm62, %v1179, 0.0
    %1189 = vadd.xlane.f32.xlu0 %v1188
    %v1190 = vpop.xlane.xlu0 %1189
    %v1191 = vsel %vm62, %v1180, 0.0
    %1192 = vadd.xlane.f32.xlu0 %v1191
    %v1193 = vpop.xlane.xlu0 %1192
    %v1194 = vsel %vm62, %v1181, 0.0
    %1195 = vadd.xlane.f32.xlu0 %v1194
    %v1196 = vpop.xlane.xlu0 %1195
    %v1197 = vmul.f32 %v1187, %v81
    %v1198 = vmul.f32 %v1190, %v81
    %v1199 = vmul.f32 %v1193, %v81
    %v1200 = vmul.f32 %v1196, %v81
    %v1201 = vsub.f32 %v1178, %v1197
    %v1202 = vsub.f32 %v1179, %v1198
    %v1203 = vsub.f32 %v1180, %v1199
    %v1204 = vsub.f32 %v1181, %v1200
    %v1205 = vmul.f32 %v1201, %v1201
    %v1206 = vmul.f32 %v1202, %v1202
    %v1207 = vmul.f32 %v1203, %v1203
    %v1208 = vmul.f32 %v1204, %v1204
    %v1209 = vsel %vm62, %v1205, 0.0
    %1210 = vadd.xlane.f32.xlu0 %v1209
    %v1211 = vpop.xlane.xlu0 %1210
    %v1212 = vsel %vm62, %v1206, 0.0
    %1213 = vadd.xlane.f32.xlu0 %v1212
    %v1214 = vpop.xlane.xlu0 %1213
    %v1215 = vsel %vm62, %v1207, 0.0
    %1216 = vadd.xlane.f32.xlu0 %v1215
    %v1217 = vpop.xlane.xlu0 %1216
    %v1218 = vsel %vm62, %v1208, 0.0
    %1219 = vadd.xlane.f32.xlu0 %v1218
    %v1220 = vpop.xlane.xlu0 %1219
    %v1221 = vmul.f32 %v1211, %v81
    %v1222 = vmul.f32 %v1214, %v81
    %v1223 = vmul.f32 %v1217, %v81
    %v1224 = vmul.f32 %v1220, %v81
    %v1225 = vadd.f32 %v1221, 1e-05
    %v1226 = vadd.f32 %v1222, 1e-05
    %v1227 = vadd.f32 %v1223, 1e-05
    %v1228 = vadd.f32 %v1224, 1e-05
    %v1229 = vrsqrt.pop %v1225
    %v1230 = vmul.f32 %v1229, %v1225
    %v1231 = vmul.f32 %v1230, %v1229
    %v1232 = vmul.f32 0.5, %v1231
    %v1233 = vsub.f32 1.5, %v1232
    %v1234 = vmul.f32 %v1229, %v1233
    %vm1235 = vweird.f32 %v1225
    %vm1236 = vweird.f32 %v1229
    %vm1237 = vmor %vm1235, %vm1236
    %v1238 = vsel %vm1237, %v1229, %v1234
    %v1239 = vrsqrt.pop %v1226
    %v1240 = vmul.f32 %v1239, %v1226
    %v1241 = vmul.f32 %v1240, %v1239
    %v1242 = vmul.f32 0.5, %v1241
    %v1243 = vsub.f32 1.5, %v1242
    %v1244 = vmul.f32 %v1239, %v1243
    %vm1245 = vweird.f32 %v1226
    %vm1246 = vweird.f32 %v1239
    %vm1247 = vmor %vm1245, %vm1246
    %v1248 = vsel %vm1247, %v1239, %v1244
    %v1249 = vrsqrt.pop %v1227
    %v1250 = vmul.f32 %v1249, %v1227
    %v1251 = vmul.f32 %v1250, %v1249
    %v1252 = vmul.f32 0.5, %v1251
    %v1253 = vsub.f32 1.5, %v1252
    %v1254 = vmul.f32 %v1249, %v1253
    %vm1255 = vweird.f32 %v1227
    %vm1256 = vweird.f32 %v1249
    %vm1257 = vmor %vm1255, %vm1256
    %v1258 = vsel %vm1257, %v1249, %v1254
    %v1259 = vrsqrt.pop %v1228
    %v1260 = vmul.f32 %v1259, %v1228
    %v1261 = vmul.f32 %v1260, %v1259
    %v1262 = vmul.f32 0.5, %v1261
    %v1263 = vsub.f32 1.5, %v1262
    %v1264 = vmul.f32 %v1259, %v1263
    %vm1265 = vweird.f32 %v1228
    %vm1266 = vweird.f32 %v1259
    %vm1267 = vmor %vm1265, %vm1266
    %v1268 = vsel %vm1267, %v1259, %v1264
    %v1269 = vmul.f32 %v1201, %v1238
    %v1270 = vmul.f32 %v1202, %v1248
    %v1271 = vmul.f32 %v1203, %v1258
    %v1272 = vmul.f32 %v1204, %v1268
    %v1273 = vperm.slane %v1183, 0
    %v1274 = vmul.f32 %v1269, %v1273
    %v1275 = vmul.f32 %v1270, %v1273
    %v1276 = vmul.f32 %v1271, %v1273
    %v1277 = vmul.f32 %v1272, %v1273
    %v1278 = vperm.slane %v1183, 1
    %v1279 = vadd.f32 %v1274, %v1278
    %v1280 = vadd.f32 %v1275, %v1278
    %v1281 = vadd.f32 %v1276, %v1278
    %v1282 = vadd.f32 %v1277, %v1278
    %v1283 = vpack.c.bf16 %v1280, %v1279
    %v1284 = vpack.c.bf16 %v1282, %v1281
    %s1285 = scalar_lea.vmem %s2, 16
    %v1286 = vld [vmem:[%s1285] sm:$0xf]
    %v1287 = vld [vmem:[%s1285 + $0x4] sm:$0xf]
    %v1288 = vld [vmem:[%s1285 + $0x8] sm:$0xf]
    %v1289 = vld [vmem:[%s1285 + $0xc] sm:$0xf]
    %v1290 = vperm.slane %v1183, 2
    %v1295 = vunpack.c.l.b16 %v1286
    %v1296 = vunpack.c.l.b16 %v1287
    %v1297 = vunpack.c.l.b16 %v1288
    %v1298 = vunpack.c.l.b16 %v1289
    %v1299 = vpack.c.b16 %v1296, %v1295
    %v1300 = vpack.c.b16 %v1298, %v1297
    %v1304 = vsel %vm62, %v1283, 0
    %v1307 = vsel %vm62, %v1284, 0
    %1309 = vmatpush.bf16.msra.mxu0 0
    %1310 = vmatpush.bf16.msra.mxu0 0
    %1311 = vmatpush.bf16.msra.mxu0 0
    %1312 = vmatpush.bf16.msra.mxu0 0
    %1313 = vmatpush.bf16.msra.mxu0 0
    %1314 = vmatpush.bf16.msra.mxu0 0
    %1315 = vmatpush.bf16.msra.mxu0 %v1300
    %1316 = vmatpush.bf16.msra.mxu0 %v1299
    %1317 = vmatmul.bf16.gmra.mxu0 %v1304
    %v1318 = vpop.f32.mrf.mxu0
    %v1319 = vadd.f32 %v1290, %v1318
    %v1320 = vpop.f32.mrf.mxu0
    %v1321 = vadd.f32 %v1290, %v1320
    %1322 = vmatmul.bf16.gmra.mxu0 %v1307
    %v1323 = vpop.f32.mrf.mxu0
    %v1324 = vadd.f32 %v1290, %v1323
    %v1325 = vpop.f32.mrf.mxu0
    %v1326 = vadd.f32 %v1290, %v1325
    %1327 = vdwg.mxu0
    %v1328 = vpack.c.bf16 %v1321, %v1319
    %v1329 = vpack.c.bf16 %v1326, %v1324
    %1332 = vrot.lane.b32.xlu0 %v1328, 96
    %v1333 = vpop.permute.xlu0 %1332
    %1334 = vrot.lane.b32.xlu0 %v1329, 96
    %v1335 = vpop.permute.xlu0 %1334
    %1338 = vmatpush.bf16.msra.mxu0 0
    %1339 = vmatpush.bf16.msra.mxu0 0
    %1340 = vmatpush.bf16.msra.mxu0 0
    %1341 = vmatpush.bf16.msra.mxu0 0
    %1342 = vmatpush.bf16.msra.mxu0 0
    %1343 = vmatpush.bf16.msra.mxu0 0
    %1344 = vmatpush.bf16.msra.mxu0 %v1335
    %1345 = vmatpush.bf16.msra.mxu0 %v1333
    %1346 = vmatmul.bf16.gmra.mxu0 %v279
    %v1347 = vpop.f32.mrf.mxu0
    %v1348 = vadd.f32 0.0, %v1347
    %v1349 = vpop.f32.mrf.mxu0
    %v1350 = vadd.f32 0.0, %v1349
    %1351 = vmatmul.bf16.gmra.mxu0 %v282
    %v1352 = vpop.f32.mrf.mxu0
    %v1353 = vadd.f32 0.0, %v1352
    %v1354 = vpop.f32.mrf.mxu0
    %v1355 = vadd.f32 0.0, %v1354
    %1356 = vmatmul.bf16.gmra.mxu0 %v285
    %v1357 = vpop.f32.mrf.mxu0
    %v1358 = vadd.f32 0.0, %v1357
    %v1359 = vpop.f32.mrf.mxu0
    %v1360 = vadd.f32 0.0, %v1359
    %1361 = vmatmul.bf16.gmra.mxu0 %v288
    %v1362 = vpop.f32.mrf.mxu0
    %v1363 = vadd.f32 0.0, %v1362
    %v1364 = vpop.f32.mrf.mxu0
    %v1365 = vadd.f32 0.0, %v1364
    %1366 = vmatmul.bf16.gmra.mxu0 %v291
    %v1367 = vpop.f32.mrf.mxu0
    %v1368 = vadd.f32 0.0, %v1367
    %v1369 = vpop.f32.mrf.mxu0
    %v1370 = vadd.f32 0.0, %v1369
    %1371 = vmatmul.bf16.gmra.mxu0 %v294
    %v1372 = vpop.f32.mrf.mxu0
    %v1373 = vadd.f32 0.0, %v1372
    %v1374 = vpop.f32.mrf.mxu0
    %v1375 = vadd.f32 0.0, %v1374
    %1376 = vmatmul.bf16.gmra.mxu0 %v297
    %v1377 = vpop.f32.mrf.mxu0
    %v1378 = vadd.f32 0.0, %v1377
    %v1379 = vpop.f32.mrf.mxu0
    %v1380 = vadd.f32 0.0, %v1379
    %1381 = vmatmul.bf16.gmra.mxu0 %v300
    %v1382 = vpop.f32.mrf.mxu0
    %v1383 = vadd.f32 0.0, %v1382
    %v1384 = vpop.f32.mrf.mxu0
    %v1385 = vadd.f32 0.0, %v1384
    %1386 = vdwg.mxu0
    %v1387 = vmul.f32 %v1348, %v351
    %v1388 = vmul.f32 %v1350, %v352
    %v1389 = vmul.f32 %v1353, %v353
    %v1390 = vmul.f32 %v1355, %v354
    %v1391 = vmul.f32 %v1358, %v355
    %v1392 = vmul.f32 %v1360, %v356
    %v1393 = vmul.f32 %v1363, %v357
    %v1394 = vmul.f32 %v1365, %v358
    %v1395 = vmul.f32 %v1368, %v359
    %v1396 = vmul.f32 %v1370, %v360
    %v1397 = vmul.f32 %v1373, %v361
    %v1398 = vmul.f32 %v1375, %v362
    %v1399 = vmul.f32 %v1378, %v363
    %v1400 = vmul.f32 %v1380, %v364
    %v1401 = vmul.f32 %v1383, %v365
    %v1402 = vmul.f32 %v1385, %v366
    %v1403 = vpack.c.bf16 %v1388, %v1387
    %v1404 = vpack.c.bf16 %v1390, %v1389
    %v1405 = vpack.c.bf16 %v1392, %v1391
    %v1406 = vpack.c.bf16 %v1394, %v1393
    %v1407 = vpack.c.bf16 %v1396, %v1395
    %v1408 = vpack.c.bf16 %v1398, %v1397
    %v1409 = vpack.c.bf16 %v1400, %v1399
    %v1410 = vpack.c.bf16 %v1402, %v1401
    %v1411 = vmul.f32 %v1348, %v408
    %v1412 = vmul.f32 %v1350, %v410
    %v1413 = vmul.f32 %v1353, %v412
    %v1414 = vmul.f32 %v1355, %v414
    %v1415 = vmul.f32 %v1358, %v416
    %v1416 = vmul.f32 %v1360, %v418
    %v1417 = vmul.f32 %v1363, %v420
    %v1418 = vmul.f32 %v1365, %v422
    %v1419 = vmul.f32 %v1368, %v424
    %v1420 = vmul.f32 %v1370, %v426
    %v1421 = vmul.f32 %v1373, %v428
    %v1422 = vmul.f32 %v1375, %v430
    %v1423 = vmul.f32 %v1378, %v432
    %v1424 = vmul.f32 %v1380, %v434
    %v1425 = vmul.f32 %v1383, %v436
    %v1426 = vmul.f32 %v1385, %v438
    %v1427 = vpack.c.bf16 %v1412, %v1411
    %v1428 = vpack.c.bf16 %v1414, %v1413
    %v1429 = vpack.c.bf16 %v1416, %v1415
    %v1430 = vpack.c.bf16 %v1418, %v1417
    %v1431 = vpack.c.bf16 %v1420, %v1419
    %v1432 = vpack.c.bf16 %v1422, %v1421
    %v1433 = vpack.c.bf16 %v1424, %v1423
    %v1434 = vpack.c.bf16 %v1426, %v1425
    %s1435 = scalar_lea.vmem %s3, 32
    %v1436 = vld [vmem:[%s1435] sm:$0xff]
    %v1437 = vld [vmem:[%s1435 + $0x8] sm:$0xff]
    %v1438 = vld [vmem:[%s1435 + $0x10] sm:$0xff]
    %v1439 = vld [vmem:[%s1435 + $0x18] sm:$0xff]
    %v1441 = vsel %vm62, %v1328, 0
    %v1444 = vsel %vm62, %v1329, 0
    %v1447 = vsel %vm62, %v1403, 0
    %v1450 = vsel %vm62, %v1404, 0
    %v1453 = vsel %vm62, %v1405, 0
    %v1456 = vsel %vm62, %v1406, 0
    %v1459 = vsel %vm62, %v1407, 0
    %v1462 = vsel %vm62, %v1408, 0
    %v1465 = vsel %vm62, %v1409, 0
    %v1468 = vsel %vm62, %v1410, 0
    %1470 = vmatpush.bf16.xpose.msra.mxu0 %v1468
    %1471 = vmatpush.bf16.xpose.msra.mxu0 %v1465
    %1472 = vmatpush.bf16.xpose.msra.mxu0 %v1462
    %1473 = vmatpush.bf16.xpose.msra.mxu0 %v1459
    %1474 = vmatpush.bf16.xpose.msra.mxu0 %v1456
    %1475 = vmatpush.bf16.xpose.msra.mxu0 %v1453
    %1476 = vmatpush.bf16.xpose.msra.mxu0 %v1450
    %1477 = vmatpush.bf16.xpose.msra.mxu0 %v1447
    %1478 = vmatmul.bf16.gmra.mxu0 %v1441
    %v1479 = vpop.f32.mrf.mxu0
    %v1480 = vadd.f32 %v1436, %v1479
    %v1481 = vpop.f32.mrf.mxu0
    %v1482 = vadd.f32 %v1437, %v1481
    %1483 = vmatmul.bf16.gmra.mxu0 %v1444
    %v1484 = vpop.f32.mrf.mxu0
    %v1485 = vadd.f32 %v1438, %v1484
    %v1486 = vpop.f32.mrf.mxu0
    %v1487 = vadd.f32 %v1439, %v1486
    %1488 = vdwg.mxu0
    %1489 = vmax.xlane.f32.xlu0 %v1480
    %v1490 = vpop.xlane.xlu0 %1489
    %1491 = vmax.xlane.f32.xlu0 %v1482
    %v1492 = vpop.xlane.xlu0 %1491
    %1493 = vmax.xlane.f32.xlu0 %v1485
    %v1494 = vpop.xlane.xlu0 %1493
    %1495 = vmax.xlane.f32.xlu0 %v1487
    %v1496 = vpop.xlane.xlu0 %1495
    %v1497 = vsub.f32 %v1480, %v1490
    %v1498 = vsub.f32 %v1482, %v1492
    %v1499 = vsub.f32 %v1485, %v1494
    %v1500 = vsub.f32 %v1487, %v1496
    %v1501 = vmul.f32 %v1497, 1.442695
    %v1502 = vpow.pop %v1501
    %v1503 = vmul.f32 %v1498, 1.442695
    %v1504 = vpow.pop %v1503
    %v1505 = vmul.f32 %v1499, 1.442695
    %v1506 = vpow.pop %v1505
    %v1507 = vmul.f32 %v1500, 1.442695
    %v1508 = vpow.pop %v1507
    %v1509 = vpack.c.bf16 %v1504, %v1502
    %v1510 = vpack.c.bf16 %v1508, %v1506
    %1511 = vmatpush.bf16.msra.mxu0 %v609
    %1512 = vmatpush.bf16.msra.mxu0 %v608
    %1513 = vmatpush.bf16.msra.mxu0 %v607
    %1514 = vmatpush.bf16.msra.mxu0 %v606
    %1515 = vmatpush.bf16.msra.mxu0 %v605
    %1516 = vmatpush.bf16.msra.mxu0 %v604
    %1517 = vmatpush.bf16.msra.mxu0 %v603
    %1518 = vmatpush.bf16.msra.mxu0 %v602
    %1519 = vmatmul.bf16.gmra.mxu0 %v1509
    %v1520 = vpop.f32.mrf.mxu0
    %v1521 = vadd.f32 0.0, %v1520
    %v1522 = vpop.f32.mrf.mxu0
    %v1523 = vadd.f32 0.0, %v1522
    %1524 = vmatmul.bf16.gmra.mxu0 %v1510
    %v1525 = vpop.f32.mrf.mxu0
    %v1526 = vadd.f32 0.0, %v1525
    %v1527 = vpop.f32.mrf.mxu0
    %v1528 = vadd.f32 0.0, %v1527
    %1529 = vdwg.mxu0
    %v1530 = vrcp.pop %v1521
    %v1531 = vrcp.pop %v1523
    %v1532 = vrcp.pop %v1526
    %v1533 = vrcp.pop %v1528
    %v1534 = vmul.f32 %v1502, %v1530
    %v1535 = vmul.f32 %v1504, %v1531
    %v1536 = vmul.f32 %v1506, %v1532
    %v1537 = vmul.f32 %v1508, %v1533
    %v1538 = vpack.c.bf16 %v1535, %v1534
    %v1539 = vpack.c.bf16 %v1537, %v1536
    %1548 = vrot.lane.b32.xlu0 %v1427, 96
    %v1549 = vpop.permute.xlu0 %1548
    %1550 = vrot.lane.b32.xlu0 %v1428, 96
    %v1551 = vpop.permute.xlu0 %1550
    %1552 = vrot.lane.b32.xlu0 %v1429, 96
    %v1553 = vpop.permute.xlu0 %1552
    %1554 = vrot.lane.b32.xlu0 %v1430, 96
    %v1555 = vpop.permute.xlu0 %1554
    %1556 = vrot.lane.b32.xlu0 %v1431, 96
    %v1557 = vpop.permute.xlu0 %1556
    %1558 = vrot.lane.b32.xlu0 %v1432, 96
    %v1559 = vpop.permute.xlu0 %1558
    %1560 = vrot.lane.b32.xlu0 %v1433, 96
    %v1561 = vpop.permute.xlu0 %1560
    %1562 = vrot.lane.b32.xlu0 %v1434, 96
    %v1563 = vpop.permute.xlu0 %1562
    %1572 = vmatpush.bf16.msra.mxu0 %v1563
    %1573 = vmatpush.bf16.msra.mxu0 %v1561
    %1574 = vmatpush.bf16.msra.mxu0 %v1559
    %1575 = vmatpush.bf16.msra.mxu0 %v1557
    %1576 = vmatpush.bf16.msra.mxu0 %v1555
    %1577 = vmatpush.bf16.msra.mxu0 %v1553
    %1578 = vmatpush.bf16.msra.mxu0 %v1551
    %1579 = vmatpush.bf16.msra.mxu0 %v1549
    %1580 = vmatmul.bf16.gmra.mxu0 %v1538
    %v1581 = vpop.f32.mrf.mxu0
    %v1582 = vadd.f32 0.0, %v1581
    %v1583 = vpop.f32.mrf.mxu0
    %v1584 = vadd.f32 0.0, %v1583
    %1585 = vmatmul.bf16.gmra.mxu0 %v1539
    %v1586 = vpop.f32.mrf.mxu0
    %v1587 = vadd.f32 0.0, %v1586
    %v1588 = vpop.f32.mrf.mxu0
    %v1589 = vadd.f32 0.0, %v1588
    %1590 = vdwg.mxu0
    %v1591 = vpack.c.bf16 %v1584, %v1582
    %v1592 = vpack.c.bf16 %v1589, %v1587
    %s1593 = scalar_lea.vmem %s4, 16
    %v1594 = vld [vmem:[%s1593] sm:$0xf]
    %v1595 = vld [vmem:[%s1593 + $0x4] sm:$0xf]
    %v1596 = vld [vmem:[%s1593 + $0x8] sm:$0xf]
    %v1597 = vld [vmem:[%s1593 + $0xc] sm:$0xf]
    %v1602 = vunpack.c.l.b16 %v1594
    %v1603 = vunpack.c.l.b16 %v1595
    %v1604 = vunpack.c.l.b16 %v1596
    %v1605 = vunpack.c.l.b16 %v1597
    %v1606 = vpack.c.b16 %v1603, %v1602
    %v1607 = vpack.c.b16 %v1605, %v1604
    %v1611 = vsel %vm62, %v1591, 0
    %v1614 = vsel %vm62, %v1592, 0
    %1616 = vmatpush.bf16.msra.mxu0 0
    %1617 = vmatpush.bf16.msra.mxu0 0
    %1618 = vmatpush.bf16.msra.mxu0 0
    %1619 = vmatpush.bf16.msra.mxu0 0
    %1620 = vmatpush.bf16.msra.mxu0 0
    %1621 = vmatpush.bf16.msra.mxu0 0
    %1622 = vmatpush.bf16.msra.mxu0 %v1607
    %1623 = vmatpush.bf16.msra.mxu0 %v1606
    %1624 = vmatmul.bf16.gmra.mxu0 %v1611
    %v1625 = vpop.f32.mrf.mxu0
    %v1626 = vadd.f32 0.0, %v1625
    %v1627 = vpop.f32.mrf.mxu0
    %v1628 = vadd.f32 0.0, %v1627
    %1629 = vmatmul.bf16.gmra.mxu0 %v1614
    %v1630 = vpop.f32.mrf.mxu0
    %v1631 = vadd.f32 0.0, %v1630
    %v1632 = vpop.f32.mrf.mxu0
    %v1633 = vadd.f32 0.0, %v1632
    %1634 = vdwg.mxu0
    %v1635 = vadd.f32 %v1178, %v1626
    %v1636 = vadd.f32 %v1179, %v1628
    %v1637 = vadd.f32 %v1180, %v1631
    %v1638 = vadd.f32 %v1181, %v1633
    %v1639 = vperm.slane %v1183, 3
    %v1640 = vadd.f32 %v1635, %v1639
    %v1641 = vadd.f32 %v1636, %v1639
    %v1642 = vadd.f32 %v1637, %v1639
    %v1643 = vadd.f32 %v1638, %v1639
    %s1644 = scalar_lea.vmem [#allocation2], 416
    %v1645 = vld [vmem:[%s1644] sm:$0xff]
    %v1646 = vld [vmem:[%s1644 + $0x8] sm:$0xff]
    %v1647 = vld [vmem:[%s1644 + $0x10] sm:$0xff]
    %v1648 = vld [vmem:[%s1644 + $0x18] sm:$0xff]
    %v1649 = vmul.f32 %v1645, %v1640
    %v1650 = vmul.f32 %v1646, %v1641
    %v1651 = vmul.f32 %v1647, %v1642
    %v1652 = vmul.f32 %v1648, %v1643
    %s1653 = scalar_lea.vmem [#allocation2], 288
    %v1654 = vld [vmem:[%s1653] sm:$0xff]
    %v1655 = vld [vmem:[%s1653 + $0x8] sm:$0xff]
    %v1656 = vld [vmem:[%s1653 + $0x10] sm:$0xff]
    %v1657 = vld [vmem:[%s1653 + $0x18] sm:$0xff]
    %v1658 = vrot.slane %v1640, 3
    %v1659 = vrot.slane %v1641, 3
    %v1660 = vrot.slane %v1642, 3
    %v1661 = vrot.slane %v1643, 3
    %v1662 = vsel %vm769, %v1660, %v1661
    %v1663 = vsel %vm769, %v1659, %v1660
    %v1664 = vsel %vm769, %v1658, %v1659
    %v1665 = vsel %vm769, %v1661, %v1658
    %v1666 = vmul.f32 %v1654, %v1665
    %v1667 = vmul.f32 %v1655, %v1664
    %v1668 = vmul.f32 %v1656, %v1663
    %v1669 = vmul.f32 %v1657, %v1662
    %v1670 = vadd.f32 %v1649, %v1666
    %v1671 = vadd.f32 %v1650, %v1667
    %v1672 = vadd.f32 %v1651, %v1668
    %v1673 = vadd.f32 %v1652, %v1669
    %s1674 = scalar_lea.vmem [#allocation2], 320
    %v1675 = vld [vmem:[%s1674] sm:$0xff]
    %v1676 = vld [vmem:[%s1674 + $0x8] sm:$0xff]
    %v1677 = vld [vmem:[%s1674 + $0x10] sm:$0xff]
    %v1678 = vld [vmem:[%s1674 + $0x18] sm:$0xff]
    %v1679 = vrot.slane %v1640, 4
    %v1680 = vrot.slane %v1641, 4
    %v1681 = vrot.slane %v1642, 4
    %v1682 = vrot.slane %v1643, 4
    %v1683 = vsel %vm791, %v1681, %v1682
    %v1684 = vsel %vm791, %v1680, %v1681
    %v1685 = vsel %vm791, %v1679, %v1680
    %v1686 = vsel %vm791, %v1682, %v1679
    %v1687 = vmul.f32 %v1675, %v1686
    %v1688 = vmul.f32 %v1676, %v1685
    %v1689 = vmul.f32 %v1677, %v1684
    %v1690 = vmul.f32 %v1678, %v1683
    %v1691 = vadd.f32 %v1670, %v1687
    %v1692 = vadd.f32 %v1671, %v1688
    %v1693 = vadd.f32 %v1672, %v1689
    %v1694 = vadd.f32 %v1673, %v1690
    %s1695 = scalar_lea.vmem [#allocation2], 352
    %v1696 = vld [vmem:[%s1695] sm:$0xff]
    %v1697 = vld [vmem:[%s1695 + $0x8] sm:$0xff]
    %v1698 = vld [vmem:[%s1695 + $0x10] sm:$0xff]
    %v1699 = vld [vmem:[%s1695 + $0x18] sm:$0xff]
    %v1700 = vrot.slane %v1640, 5
    %v1701 = vrot.slane %v1641, 5
    %v1702 = vrot.slane %v1642, 5
    %v1703 = vrot.slane %v1643, 5
    %v1704 = vsel %vm813, %v1702, %v1703
    %v1705 = vsel %vm813, %v1701, %v1702
    %v1706 = vsel %vm813, %v1700, %v1701
    %v1707 = vsel %vm813, %v1703, %v1700
    %v1708 = vmul.f32 %v1696, %v1707
    %v1709 = vmul.f32 %v1697, %v1706
    %v1710 = vmul.f32 %v1698, %v1705
    %v1711 = vmul.f32 %v1699, %v1704
    %v1712 = vadd.f32 %v1691, %v1708
    %v1713 = vadd.f32 %v1692, %v1709
    %v1714 = vadd.f32 %v1693, %v1710
    %v1715 = vadd.f32 %v1694, %v1711
    %s1716 = scalar_lea.vmem [#allocation2], 384
    %v1717 = vld [vmem:[%s1716] sm:$0xff]
    %v1718 = vld [vmem:[%s1716 + $0x8] sm:$0xff]
    %v1719 = vld [vmem:[%s1716 + $0x10] sm:$0xff]
    %v1720 = vld [vmem:[%s1716 + $0x18] sm:$0xff]
    %v1721 = vrot.slane %v1640, 7
    %v1722 = vrot.slane %v1641, 7
    %v1723 = vrot.slane %v1642, 7
    %v1724 = vrot.slane %v1643, 7
    %v1725 = vsel %vm835, %v1723, %v1724
    %v1726 = vsel %vm835, %v1722, %v1723
    %v1727 = vsel %vm835, %v1721, %v1722
    %v1728 = vsel %vm835, %v1724, %v1721
    %v1729 = vmul.f32 %v1717, %v1728
    %v1730 = vmul.f32 %v1718, %v1727
    %v1731 = vmul.f32 %v1719, %v1726
    %v1732 = vmul.f32 %v1720, %v1725
    %v1733 = vadd.f32 %v1712, %v1729
    %v1734 = vadd.f32 %v1713, %v1730
    %v1735 = vadd.f32 %v1714, %v1731
    %v1736 = vadd.f32 %v1715, %v1732
    %s1737 = scalar_lea.vmem [#allocation2], 448
    %v1738 = vld [vmem:[%s1737] sm:$0xff]
    %v1739 = vld [vmem:[%s1737 + $0x8] sm:$0xff]
    %v1740 = vld [vmem:[%s1737 + $0x10] sm:$0xff]
    %v1741 = vld [vmem:[%s1737 + $0x18] sm:$0xff]
    %v1742 = vrot.slane %v1640, 1
    %v1743 = vrot.slane %v1641, 1
    %v1744 = vrot.slane %v1642, 1
    %v1745 = vrot.slane %v1643, 1
    %v1746 = vsel %vm857, %v1744, %v1745
    %v1747 = vsel %vm857, %v1743, %v1744
    %v1748 = vsel %vm857, %v1742, %v1743
    %v1749 = vsel %vm857, %v1745, %v1742
    %v1750 = vmul.f32 %v1738, %v1748
    %v1751 = vmul.f32 %v1739, %v1747
    %v1752 = vmul.f32 %v1740, %v1746
    %v1753 = vmul.f32 %v1741, %v1749
    %v1754 = vadd.f32 %v1733, %v1750
    %v1755 = vadd.f32 %v1734, %v1751
    %v1756 = vadd.f32 %v1735, %v1752
    %v1757 = vadd.f32 %v1736, %v1753
    %s1758 = scalar_lea.vmem [#allocation2], 480
    %v1759 = vld [vmem:[%s1758] sm:$0xff]
    %v1760 = vld [vmem:[%s1758 + $0x8] sm:$0xff]
    %v1761 = vld [vmem:[%s1758 + $0x10] sm:$0xff]
    %v1762 = vld [vmem:[%s1758 + $0x18] sm:$0xff]
    %v1763 = vmul.f32 %v1759, %v1664
    %v1764 = vmul.f32 %v1760, %v1663
    %v1765 = vmul.f32 %v1761, %v1662
    %v1766 = vmul.f32 %v1762, %v1665
    %v1767 = vadd.f32 %v1754, %v1763
    %v1768 = vadd.f32 %v1755, %v1764
    %v1769 = vadd.f32 %v1756, %v1765
    %v1770 = vadd.f32 %v1757, %v1766
    %s1771 = scalar_lea.vmem [#allocation2], 512
    %v1772 = vld [vmem:[%s1771] sm:$0xff]
    %v1773 = vld [vmem:[%s1771 + $0x8] sm:$0xff]
    %v1774 = vld [vmem:[%s1771 + $0x10] sm:$0xff]
    %v1775 = vld [vmem:[%s1771 + $0x18] sm:$0xff]
    %v1776 = vmul.f32 %v1772, %v1685
    %v1777 = vmul.f32 %v1773, %v1684
    %v1778 = vmul.f32 %v1774, %v1683
    %v1779 = vmul.f32 %v1775, %v1686
    %v1780 = vadd.f32 %v1767, %v1776
    %v1781 = vadd.f32 %v1768, %v1777
    %v1782 = vadd.f32 %v1769, %v1778
    %v1783 = vadd.f32 %v1770, %v1779
    %s1784 = scalar_lea.vmem [#allocation2], 544
    %v1785 = vld [vmem:[%s1784] sm:$0xff]
    %v1786 = vld [vmem:[%s1784 + $0x8] sm:$0xff]
    %v1787 = vld [vmem:[%s1784 + $0x10] sm:$0xff]
    %v1788 = vld [vmem:[%s1784 + $0x18] sm:$0xff]
    %v1789 = vmul.f32 %v1785, %v1706
    %v1790 = vmul.f32 %v1786, %v1705
    %v1791 = vmul.f32 %v1787, %v1704
    %v1792 = vmul.f32 %v1788, %v1707
    %v1793 = vadd.f32 %v1780, %v1789
    %v1794 = vadd.f32 %v1781, %v1790
    %v1795 = vadd.f32 %v1782, %v1791
    %v1796 = vadd.f32 %v1783, %v1792
    %v1797 = vperm.slane %v1183, 4
    %v1798 = vadd.f32 %v1793, %v1797
    %v1799 = vadd.f32 %v1794, %v1797
    %v1800 = vadd.f32 %v1795, %v1797
    %v1801 = vadd.f32 %v1796, %v1797
    %v1802 = vsel %vm62, %v1798, 0.0
    %1803 = vadd.xlane.f32.xlu0 %v1802
    %v1804 = vpop.xlane.xlu0 %1803
    %v1805 = vsel %vm62, %v1799, 0.0
    %1806 = vadd.xlane.f32.xlu0 %v1805
    %v1807 = vpop.xlane.xlu0 %1806
    %v1808 = vsel %vm62, %v1800, 0.0
    %1809 = vadd.xlane.f32.xlu0 %v1808
    %v1810 = vpop.xlane.xlu0 %1809
    %v1811 = vsel %vm62, %v1801, 0.0
    %1812 = vadd.xlane.f32.xlu0 %v1811
    %v1813 = vpop.xlane.xlu0 %1812
    %v1814 = vmul.f32 %v1804, %v81
    %v1815 = vmul.f32 %v1807, %v81
    %v1816 = vmul.f32 %v1810, %v81
    %v1817 = vmul.f32 %v1813, %v81
    %v1818 = vsub.f32 %v1798, %v1814
    %v1819 = vsub.f32 %v1799, %v1815
    %v1820 = vsub.f32 %v1800, %v1816
    %v1821 = vsub.f32 %v1801, %v1817
    %v1822 = vmul.f32 %v1818, %v1818
    %v1823 = vmul.f32 %v1819, %v1819
    %v1824 = vmul.f32 %v1820, %v1820
    %v1825 = vmul.f32 %v1821, %v1821
    %v1826 = vsel %vm62, %v1822, 0.0
    %1827 = vadd.xlane.f32.xlu0 %v1826
    %v1828 = vpop.xlane.xlu0 %1827
    %v1829 = vsel %vm62, %v1823, 0.0
    %1830 = vadd.xlane.f32.xlu0 %v1829
    %v1831 = vpop.xlane.xlu0 %1830
    %v1832 = vsel %vm62, %v1824, 0.0
    %1833 = vadd.xlane.f32.xlu0 %v1832
    %v1834 = vpop.xlane.xlu0 %1833
    %v1835 = vsel %vm62, %v1825, 0.0
    %1836 = vadd.xlane.f32.xlu0 %v1835
    %v1837 = vpop.xlane.xlu0 %1836
    %v1838 = vmul.f32 %v1828, %v81
    %v1839 = vmul.f32 %v1831, %v81
    %v1840 = vmul.f32 %v1834, %v81
    %v1841 = vmul.f32 %v1837, %v81
    %v1842 = vadd.f32 %v1838, 1e-05
    %v1843 = vadd.f32 %v1839, 1e-05
    %v1844 = vadd.f32 %v1840, 1e-05
    %v1845 = vadd.f32 %v1841, 1e-05
    %v1846 = vrsqrt.pop %v1842
    %v1847 = vmul.f32 %v1846, %v1842
    %v1848 = vmul.f32 %v1847, %v1846
    %v1849 = vmul.f32 0.5, %v1848
    %v1850 = vsub.f32 1.5, %v1849
    %v1851 = vmul.f32 %v1846, %v1850
    %vm1852 = vweird.f32 %v1842
    %vm1853 = vweird.f32 %v1846
    %vm1854 = vmor %vm1852, %vm1853
    %v1855 = vsel %vm1854, %v1846, %v1851
    %v1856 = vrsqrt.pop %v1843
    %v1857 = vmul.f32 %v1856, %v1843
    %v1858 = vmul.f32 %v1857, %v1856
    %v1859 = vmul.f32 0.5, %v1858
    %v1860 = vsub.f32 1.5, %v1859
    %v1861 = vmul.f32 %v1856, %v1860
    %vm1862 = vweird.f32 %v1843
    %vm1863 = vweird.f32 %v1856
    %vm1864 = vmor %vm1862, %vm1863
    %v1865 = vsel %vm1864, %v1856, %v1861
    %v1866 = vrsqrt.pop %v1844
    %v1867 = vmul.f32 %v1866, %v1844
    %v1868 = vmul.f32 %v1867, %v1866
    %v1869 = vmul.f32 0.5, %v1868
    %v1870 = vsub.f32 1.5, %v1869
    %v1871 = vmul.f32 %v1866, %v1870
    %vm1872 = vweird.f32 %v1844
    %vm1873 = vweird.f32 %v1866
    %vm1874 = vmor %vm1872, %vm1873
    %v1875 = vsel %vm1874, %v1866, %v1871
    %v1876 = vrsqrt.pop %v1845
    %v1877 = vmul.f32 %v1876, %v1845
    %v1878 = vmul.f32 %v1877, %v1876
    %v1879 = vmul.f32 0.5, %v1878
    %v1880 = vsub.f32 1.5, %v1879
    %v1881 = vmul.f32 %v1876, %v1880
    %vm1882 = vweird.f32 %v1845
    %vm1883 = vweird.f32 %v1876
    %vm1884 = vmor %vm1882, %vm1883
    %v1885 = vsel %vm1884, %v1876, %v1881
    %v1886 = vmul.f32 %v1818, %v1855
    %v1887 = vmul.f32 %v1819, %v1865
    %v1888 = vmul.f32 %v1820, %v1875
    %v1889 = vmul.f32 %v1821, %v1885
    %v1890 = vperm.slane %v1183, 5
    %v1891 = vmul.f32 %v1886, %v1890
    %v1892 = vmul.f32 %v1887, %v1890
    %v1893 = vmul.f32 %v1888, %v1890
    %v1894 = vmul.f32 %v1889, %v1890
    %v1895 = vperm.slane %v1183, 6
    %v1896 = vadd.f32 %v1891, %v1895
    %v1897 = vadd.f32 %v1892, %v1895
    %v1898 = vadd.f32 %v1893, %v1895
    %v1899 = vadd.f32 %v1894, %v1895
    %v1900 = vpack.c.bf16 %v1897, %v1896
    %v1901 = vpack.c.bf16 %v1899, %v1898
    %s1902 = scalar_lea.vmem %s6, 16
    %v1903 = vld [vmem:[%s1902] sm:$0xf]
    %v1904 = vld [vmem:[%s1902 + $0x4] sm:$0xf]
    %v1905 = vld [vmem:[%s1902 + $0x8] sm:$0xf]
    %v1906 = vld [vmem:[%s1902 + $0xc] sm:$0xf]
    %v1907 = vperm.slane %v1183, 7
    %v1912 = vunpack.c.l.b16 %v1903
    %v1913 = vunpack.c.l.b16 %v1904
    %v1914 = vunpack.c.l.b16 %v1905
    %v1915 = vunpack.c.l.b16 %v1906
    %v1916 = vpack.c.b16 %v1913, %v1912
    %v1917 = vpack.c.b16 %v1915, %v1914
    %v1921 = vsel %vm62, %v1900, 0
    %v1924 = vsel %vm62, %v1901, 0
    %1926 = vmatpush.bf16.msra.mxu0 0
    %1927 = vmatpush.bf16.msra.mxu0 0
    %1928 = vmatpush.bf16.msra.mxu0 0
    %1929 = vmatpush.bf16.msra.mxu0 0
    %1930 = vmatpush.bf16.msra.mxu0 0
    %1931 = vmatpush.bf16.msra.mxu0 0
    %1932 = vmatpush.bf16.msra.mxu0 %v1917
    %1933 = vmatpush.bf16.msra.mxu0 %v1916
    %1934 = vmatmul.bf16.gmra.mxu0 %v1921
    %v1935 = vpop.f32.mrf.mxu0
    %v1936 = vadd.f32 %v1907, %v1935
    %v1937 = vpop.f32.mrf.mxu0
    %v1938 = vadd.f32 %v1907, %v1937
    %1939 = vmatmul.bf16.gmra.mxu0 %v1924
    %v1940 = vpop.f32.mrf.mxu0
    %v1941 = vadd.f32 %v1907, %v1940
    %v1942 = vpop.f32.mrf.mxu0
    %v1943 = vadd.f32 %v1907, %v1942
    %1944 = vdwg.mxu0
    %v1945 = vmul.f32 %v1936, 0.5
    %v1946 = vmul.f32 %v1938, 0.5
    %v1947 = vmul.f32 %v1941, 0.5
    %v1948 = vmul.f32 %v1943, 0.5
    %v1949 = vmul.f32 %v1936, 0.044715
    %v1950 = vmul.f32 %v1938, 0.044715
    %v1951 = vmul.f32 %v1941, 0.044715
    %v1952 = vmul.f32 %v1943, 0.044715
    %v1953 = vmul.f32 %v1949, %v1936
    %v1954 = vmul.f32 %v1950, %v1938
    %v1955 = vmul.f32 %v1951, %v1941
    %v1956 = vmul.f32 %v1952, %v1943
    %v1957 = vmul.f32 %v1953, %v1936
    %v1958 = vmul.f32 %v1954, %v1938
    %v1959 = vmul.f32 %v1955, %v1941
    %v1960 = vmul.f32 %v1956, %v1943
    %v1961 = vadd.f32 %v1936, %v1957
    %v1962 = vadd.f32 %v1938, %v1958
    %v1963 = vadd.f32 %v1941, %v1959
    %v1964 = vadd.f32 %v1943, %v1960
    %v1965 = vmul.f32 %v1961, 0.7978846
    %v1966 = vmul.f32 %v1962, 0.7978846
    %v1967 = vmul.f32 %v1963, 0.7978846
    %v1968 = vmul.f32 %v1964, 0.7978846
    %v1969 = vtanh.pop %v1965
    %v1970 = vtanh.pop %v1966
    %v1971 = vtanh.pop %v1967
    %v1972 = vtanh.pop %v1968
    %v1973 = vadd.f32 %v1969, 1.0
    %v1974 = vadd.f32 %v1970, 1.0
    %v1975 = vadd.f32 %v1971, 1.0
    %v1976 = vadd.f32 %v1972, 1.0
    %v1977 = vmul.f32 %v1945, %v1973
    %v1978 = vmul.f32 %v1946, %v1974
    %v1979 = vmul.f32 %v1947, %v1975
    %v1980 = vmul.f32 %v1948, %v1976
    %v1981 = vpack.c.bf16 %v1978, %v1977
    %v1982 = vpack.c.bf16 %v1980, %v1979
    %s1983 = scalar_lea.vmem %s7, 64
    %v1984 = vld [vmem:[%s1983] sm:$0xf]
    %v1985 = vld [vmem:[%s1983 + $0x4] sm:$0xf]
    %v1986 = vld [vmem:[%s1983 + $0x8] sm:$0xf]
    %v1987 = vld [vmem:[%s1983 + $0xc] sm:$0xf]
    %v1988 = vld [vmem:[%s1983 + $0x10] sm:$0xf]
    %v1989 = vld [vmem:[%s1983 + $0x14] sm:$0xf]
    %v1990 = vld [vmem:[%s1983 + $0x18] sm:$0xf]
    %v1991 = vld [vmem:[%s1983 + $0x1c] sm:$0xf]
    %v1992 = vld [vmem:[%s1983 + $0x20] sm:$0xf]
    %v1993 = vld [vmem:[%s1983 + $0x24] sm:$0xf]
    %v1994 = vld [vmem:[%s1983 + $0x28] sm:$0xf]
    %v1995 = vld [vmem:[%s1983 + $0x2c] sm:$0xf]
    %v1996 = vld [vmem:[%s1983 + $0x30] sm:$0xf]
    %v1997 = vld [vmem:[%s1983 + $0x34] sm:$0xf]
    %v1998 = vld [vmem:[%s1983 + $0x38] sm:$0xf]
    %v1999 = vld [vmem:[%s1983 + $0x3c] sm:$0xf]
    %v2000 = vperm.slane %v1184, 0
    %v2017 = vunpack.c.l.b16 %v1984
    %v2018 = vunpack.c.l.b16 %v1985
    %v2019 = vunpack.c.l.b16 %v1986
    %v2020 = vunpack.c.l.b16 %v1987
    %v2021 = vunpack.c.l.b16 %v1988
    %v2022 = vunpack.c.l.b16 %v1989
    %v2023 = vunpack.c.l.b16 %v1990
    %v2024 = vunpack.c.l.b16 %v1991
    %v2025 = vunpack.c.l.b16 %v1992
    %v2026 = vunpack.c.l.b16 %v1993
    %v2027 = vunpack.c.l.b16 %v1994
    %v2028 = vunpack.c.l.b16 %v1995
    %v2029 = vunpack.c.l.b16 %v1996
    %v2030 = vunpack.c.l.b16 %v1997
    %v2031 = vunpack.c.l.b16 %v1998
    %v2032 = vunpack.c.l.b16 %v1999
    %v2033 = vpack.c.b16 %v2018, %v2017
    %v2034 = vpack.c.b16 %v2020, %v2019
    %v2035 = vpack.c.b16 %v2022, %v2021
    %v2036 = vpack.c.b16 %v2024, %v2023
    %v2037 = vpack.c.b16 %v2026, %v2025
    %v2038 = vpack.c.b16 %v2028, %v2027
    %v2039 = vpack.c.b16 %v2030, %v2029
    %v2040 = vpack.c.b16 %v2032, %v2031
    %2049 = vmatpush.bf16.msra.mxu0 %v2040
    %2050 = vmatpush.bf16.msra.mxu0 %v2039
    %2051 = vmatpush.bf16.msra.mxu0 %v2038
    %2052 = vmatpush.bf16.msra.mxu0 %v2037
    %2053 = vmatpush.bf16.msra.mxu0 %v2036
    %2054 = vmatpush.bf16.msra.mxu0 %v2035
    %2055 = vmatpush.bf16.msra.mxu0 %v2034
    %2056 = vmatpush.bf16.msra.mxu0 %v2033
    %2057 = vmatmul.bf16.gmra.mxu0 %v1981
    %v2058 = vpop.f32.mrf.mxu0
    %v2059 = vadd.f32 %v2000, %v2058
    %v2060 = vpop.f32.mrf.mxu0
    %v2061 = vadd.f32 %v2000, %v2060
    %2062 = vmatmul.bf16.gmra.mxu0 %v1982
    %v2063 = vpop.f32.mrf.mxu0
    %v2064 = vadd.f32 %v2000, %v2063
    %v2065 = vpop.f32.mrf.mxu0
    %v2066 = vadd.f32 %v2000, %v2065
    %2067 = vdwg.mxu0
    %v2068 = vadd.f32 %v1798, %v2059
    %v2069 = vadd.f32 %v1799, %v2061
    %v2070 = vadd.f32 %v1800, %v2064
    %v2071 = vadd.f32 %v1801, %v2066
    %2072 = vst.msk [vmem:[#allocation5] sm:$0xff] %vm62, %v2068
    %2073 = vst.msk [vmem:[#allocation5 + $0x8] sm:$0xff] %vm62, %v2069
    %2074 = vst.msk [vmem:[#allocation5 + $0x10] sm:$0xff] %vm62, %v2070
    %2075 = vst.msk [vmem:[#allocation5 + $0x18] sm:$0xff] %vm62, %v2071
    // Predicated region
    $region50: #{tpu_custom_call.1} parent=1 // pred_check
      _
    $region51: #{tpu_custom_call.1} parent=1 // pred_check_branch
      %2077 = sbr.rel (0) target = $region53
    $region52: #{tpu_custom_call.1} parent=1 // pred_region
      %2079 = vsyncadd [#allocation4], 0
      %s2080 = sshll.u32 [#allocation5], 4
      %s2081 = int_to_ptr.vmem [resolvable:$true] %s2080
      %s2082 = sshll.u32 %s11, 4
      %s2083 = int_to_ptr.hbm [resolvable:$true] %s2082
      %2088 = dma.vmem_to_hbm [thread:$0]  %s2081, 512, %s2083, [#allocation4], 128, 128, 8
    $region53: #{tpu_custom_call.1} parent=1 // pred_fallthru
      _
    // Predicated region
    $region54: #{tpu_custom_call.1} parent=1 // pred_check
      _
    $region55: #{tpu_custom_call.1} parent=1 // pred_check_branch
      %2090 = sbr.rel (0) target = $region57
    $region56: #{tpu_custom_call.1} parent=1 // pred_region
      %2092 = dma.done [#allocation4], 512
    $region57: #{tpu_custom_call.1} parent=1 // pred_fallthru
      _
    %2093 = vsyncpa [#allocation3], 1
    %2094 = vsyncpa [#allocation4], 1

</llo_original>
